<compile_context>
chip_gen: v7x
topology: tpu7x:2x2x1
jax: 0.10.0
libtpu: 0.0.40
codegen_flags: <defaults>
</compile_context>

<pallas_src>
import jax
import jax.numpy as jnp
from jax import lax
from jax.experimental import pallas as pl
from jax.experimental.pallas import tpu as pltpu


def _rho(x):
    return jnp.clip(x, 0.0, 1.0)


def _rhop(x):
    return jnp.logical_and(x >= 0.0, x <= 1.0).astype(jnp.float32)


def _round_up(x, m):
    return ((x + m - 1) // m) * m


def make_toyepcont_forward(size_tab, T, Kmax, dt, beta=0.0, no_clamp=False,
                           batch_block=None):
    """Builds a pallas_call implementing toyEPcont.forward(method='nograd')."""
    assert len(size_tab) == 3, "toyEPcont has exactly 2 state layers + data"
    n0, n1, nd = size_tab
    nh = n0 + n1
    n_steps = T if beta == 0.0 else Kmax
    add_nudge = beta > 0.0          # stepper only nudges when beta > 0
    dt = float(dt)
    beta_f = float(beta)

    def kernel(*refs):
        if add_nudge:
            (data_ref, s_ref, wb_ref, ws_ref, wd_ref, b_ref, tgt_ref,
             out_ref) = refs
        else:
            (data_ref, s_ref, wb_ref, ws_ref, wd_ref, b_ref, out_ref) = refs

        S = s_ref[...]                     # (nh, TB)  feature-major, batch on lanes
        Wb = wb_ref[...]                   # (nh, nh)  [[0, W1], [W1^T, 0]]
        Ws = ws_ref[...]                   # (nh, nh)  dt*Wb + diag(1-dt-dt*beta*m)

        # Loop-invariant external drive (hoisted out of the time loop).
        rho_d = _rho(data_ref[...])        # (nd, TB)
        Cdrive = jnp.dot(wd_ref[...], rho_d,
                         preferred_element_type=jnp.float32) + b_ref[...]  # (nh, TB)

        if add_nudge:
            tgt = tgt_ref[...]             # (nh, TB); rows >= n0 are zero
            row = lax.broadcasted_iota(jnp.int32, (nh, 1), 0)
            bm = jnp.where(row < n0, jnp.float32(beta_f), jnp.float32(0.0))
            Cstep = dt * (Cdrive + beta_f * tgt)
        else:
            Cstep = dt * Cdrive

        def general_step(S):
            # Faithful mirror of the torch stepper (handles S outside [0,1]).
            pre = jnp.dot(Wb, _rho(S),
                          preferred_element_type=jnp.float32) + Cdrive
            inside = jnp.logical_and(S >= 0.0, S <= 1.0)
            d = jnp.where(inside, pre, 0.0) - S        # rhop(S)*pre - S
            if add_nudge:
                d = d + bm * (tgt - S)
            S = S + dt * d
            if not no_clamp:
                S = _rho(S)
            return S

        def fast_step(S):
            # Valid once S in [0,1] (rho(S)==S, rhop(S)==1), clamp mode only:
            # S <- clip((dt*Wb + diag(1-dt-dt*beta*m)) @ S + dt*(Cdrive+beta*tgt))
            return _rho(jnp.dot(Ws, S, preferred_element_type=jnp.float32)
                        + Cstep)

        if (not no_clamp) and n_steps >= 1:
            S = general_step(S)            # peel step 1 (arbitrary initial S)
            rem = n_steps - 1
            if rem <= 64:
                for _ in range(rem):       # full unroll of the cheap steps
                    S = fast_step(S)
            else:
                S = lax.fori_loop(0, rem, lambda _, s: fast_step(s), S,
                                  unroll=8)
        else:
            if n_steps <= 32:
                for _ in range(n_steps):
                    S = general_step(S)
            else:
                S = lax.fori_loop(0, n_steps, lambda _, s: general_step(s), S,
                                  unroll=8)

        out_ref[...] = S

    def forward(data, s, weights, biases, target=None):
        W1, W2, W4 = [w.astype(jnp.float32) for w in weights]
        b1, b2, b4 = [b.astype(jnp.float32) for b in biases]
        s0, s1 = s
        B = data.shape[0]
        if add_nudge:
            assert target is not None

        # Batch on lanes: pad batch to a multiple of 128; >=2 blocks when possible.
        if batch_block is not None:
            TB = batch_block
        else:
            Bp0 = _round_up(B, 128)
            TB = min(Bp0, 512)
            if Bp0 > 128 and Bp0 // TB < 2 and (Bp0 // 2) % 128 == 0:
                TB = Bp0 // 2              # two blocks -> both TCs on v7x
        assert TB % 128 == 0 and TB >= 128
        Bp = _round_up(B, TB)

        def to_fm(x, rows):                # (B, rows) -> (rows, Bp), lane-padded
            x = jnp.transpose(x.astype(jnp.float32))
            return jnp.pad(x, ((0, 0), (0, Bp - B)))

        data_t = to_fm(data, nd)
        S_t = jnp.pad(
            jnp.transpose(jnp.concatenate(
                [s0.astype(jnp.float32), s1.astype(jnp.float32)], axis=1)),
            ((0, 0), (0, Bp - B)))

        # One-time weight prep (fused block weight + folded fast-step weight).
        Wblock = jnp.concatenate(
            [jnp.concatenate([jnp.zeros((n0, n0), jnp.float32), W1], axis=1),
             jnp.concatenate([W1.T, jnp.zeros((n1, n1), jnp.float32)], axis=1)],
            axis=0)                                       # (nh, nh)
        Wd = jnp.concatenate([W2, W4], axis=0)            # (nh, nd)
        bvec = jnp.concatenate([b1 + b2, b4]).reshape(nh, 1)
        mask = jnp.concatenate([jnp.ones((n0,), jnp.float32),
                                jnp.zeros((n1,), jnp.float32)])
        beta_eff = beta_f if add_nudge else 0.0
        a_diag = 1.0 - dt - dt * beta_eff * mask
        Wstep = dt * Wblock + jnp.diag(a_diag)            # (nh, nh)

        inputs = [data_t, S_t, Wblock, Wstep, Wd, bvec]

        def bspec(rows):                   # batch-tiled, lane-dense arrays
            return pl.BlockSpec((rows, TB), lambda i: (0, i))

        def wspec(r, c):                   # grid-invariant (resident) arrays
            return pl.BlockSpec((r, c), lambda i: (0, 0))

        in_specs = [bspec(nd), bspec(nh), wspec(nh, nh), wspec(nh, nh),
                    wspec(nh, nd), wspec(nh, 1)]
        if add_nudge:
            tgt_t = jnp.pad(jnp.transpose(target.astype(jnp.float32)),
                            ((0, n1), (0, Bp - B)))
            inputs.append(tgt_t)
            in_specs.append(bspec(nh))

        out_specs = bspec(nh)
        out_shape = jax.ShapeDtypeStruct((nh, Bp), jnp.float32)

        # Explicit VMEM budget (double-buffered tiles + resident weights),
        # well under the v7x 64 MiB / 32 MiB scoped budget.
        itemsize = 4
        tiled = TB * (nd + 2 * nh + (nh if add_nudge else 0))
        resident = 2 * nh * nh + nh * nd + nh
        vmem_limit = int(min(32 * 2**20,
                             max(2 * 2**20, 8 * itemsize * (tiled + resident))))

        out = pl.pallas_call(
            kernel,
            grid=(Bp // TB,),
            in_specs=in_specs,
            out_specs=out_specs,
            out_shape=out_shape,
            input_output_aliases={1: 0},   # concatenated state -> output
            compiler_params=pltpu.CompilerParams(
                dimension_semantics=("parallel",),
                vmem_limit_bytes=vmem_limit),
        )(*inputs)

        return [jnp.transpose(out[:n0, :B]), jnp.transpose(out[n0:, :B])]

    return forward


def toyepcont_forward_ref(data, s, weights, biases, T, Kmax, dt,
                          beta=0.0, target=None, no_clamp=False):
    """Pure-JAX mirror of the torch stepper (for validation)."""
    W1, W2, W4 = weights
    b1, b2, b4 = biases
    s0, s1 = s
    n_steps = T if beta == 0.0 else Kmax
    for _ in range(n_steps):
        d0 = -s0 + _rhop(s0) * (_rho(s1) @ W1.T + b1 + _rho(data) @ W2.T + b2)
        if beta > 0.0:
            d0 = d0 + beta * (target - s0)
        d1 = -s1 + _rhop(s1) * (_rho(data) @ W4.T + b4 + _rho(s0) @ W1)
        s0 = s0 + dt * d0
        s1 = s1 + dt * d1
        if not no_clamp:
            s0 = jnp.clip(s0, 0.0, 1.0)
            s1 = jnp.clip(s1, 0.0, 1.0)
    return [s0, s1]


if __name__ == "__main__":
    # args.size_tab = [n0, n1, nd]; s[0]: (B, n0), s[1]: (B, n1), data: (B, nd)
    size_tab = [8, 16, 32]
    T, Kmax, dt = 15, 10, 0.2
    n0, n1, nd = size_tab

    key = jax.random.PRNGKey(0)
    ks = jax.random.split(key, 13)

    def linear_init(kw, kb, fan_out, fan_in):
        bound = 1.0 / (fan_in ** 0.5)       # PyTorch nn.Linear default init
        W = jax.random.uniform(kw, (fan_out, fan_in), jnp.float32, -bound, bound)
        b = jax.random.uniform(kb, (fan_out,), jnp.float32, -bound, bound)
        return W, b

    W1, b1 = linear_init(ks[0], ks[1], n0, n1)   # w[1]: Linear(n1 -> n0)
    W2, b2 = linear_init(ks[2], ks[3], n0, nd)   # w[2]: Linear(nd -> n0)
    W4, b4 = linear_init(ks[4], ks[5], n1, nd)   # w[4]: Linear(nd -> n1)
    weights, biases = [W1, W2, W4], [b1, b2, b4]

    # --- free phase (beta = 0): small batch -> one 128-lane block -------------
    B1 = 16
    data1 = jax.random.uniform(ks[6], (B1, nd), jnp.float32)
    # initHidden() would give zeros; use values outside [0,1] to exercise the
    # rho'/clamp paths in the peeled first step.
    s1_init = [jax.random.uniform(ks[7], (B1, n0), jnp.float32, -0.25, 1.25),
               jax.random.uniform(ks[8], (B1, n1), jnp.float32, -0.25, 1.25)]
    ref_free = toyepcont_forward_ref(data1, s1_init, weights, biases, T, Kmax, dt)
    fwd_free = make_toyepcont_forward(size_tab, T, Kmax, dt, beta=0.0)
    got_free = jax.block_until_ready(fwd_free(data1, s1_init, weights, biases))

    # --- nudged phase (beta > 0): larger batch -> grid=(2,) of 128-lane blocks -
    beta = 0.5
    B2 = 200
    data2 = jax.random.uniform(ks[9], (B2, nd), jnp.float32)
    s2_init = [jax.random.uniform(ks[10], (B2, n0), jnp.float32, -0.25, 1.25),
               jax.random.uniform(ks[11], (B2, n1), jnp.float32, -0.25, 1.25)]
    target2 = jax.random.uniform(ks[12], (B2, n0), jnp.float32)
    ref_nudge = toyepcont_forward_ref(data2, s2_init, weights, biases, T, Kmax,
                                      dt, beta=beta, target=target2)
    fwd_nudge = make_toyepcont_forward(size_tab, T, Kmax, dt, beta=beta)
    got_nudge = jax.block_until_ready(
        fwd_nudge(data2, s2_init, weights, biases, target=target2))

    # --- no_clamp free phase (exercises the general-step loop path) -----------
    ref_nc = toyepcont_forward_ref(data1, s1_init, weights, biases, T, Kmax, dt,
                                   no_clamp=True)
    fwd_nc = make_toyepcont_forward(size_tab, T, Kmax, dt, beta=0.0,
                                    no_clamp=True)
    got_nc = jax.block_until_ready(fwd_nc(data1, s1_init, weights, biases))

    for got, want in zip(got_free + got_nudge + got_nc,
                         ref_free + ref_nudge + ref_nc):
        assert got.shape == want.shape and got.dtype == jnp.float32
        assert bool(jnp.all(jnp.isfinite(got)))
        err = float(jnp.max(jnp.abs(got - want)))
        assert jnp.allclose(got, want, rtol=2e-3, atol=2e-3), err

    print("KERNEL_OK")
</pallas_src>

<mosaic_0001>
module attributes {stable_mosaic.version = 11 : i64} {
  func.func @kernel(%arg0: i32, %arg1: memref<32x128xf32, #tpu.memory_space<vmem>>, %arg2: memref<24x128xf32, #tpu.memory_space<vmem>>, %arg3: memref<24x24xf32, #tpu.memory_space<vmem>>, %arg4: memref<24x24xf32, #tpu.memory_space<vmem>>, %arg5: memref<24x32xf32, #tpu.memory_space<vmem>>, %arg6: memref<24x1xf32, #tpu.memory_space<vmem>>, %arg7: memref<24x128xf32, #tpu.memory_space<vmem>>) attributes {dimension_semantics = [#tpu.dimension_semantics<parallel>], iteration_bounds = array<i64: 1>, scalar_prefetch = 0 : i64, scratch_operands = 0 : i64, tpu.core_type = #tpu.core_type<tc>, window_params = [{transform_indices = @transform_0, window_bounds = array<i64: 32, 128>}, {transform_indices = @transform_1, window_bounds = array<i64: 24, 128>}, {pipeline_mode = #tpu.pipeline_mode<synchronous>, transform_indices = @transform_2, window_bounds = array<i64: 24, 24>}, {pipeline_mode = #tpu.pipeline_mode<synchronous>, transform_indices = @transform_3, window_bounds = array<i64: 24, 24>}, {pipeline_mode = #tpu.pipeline_mode<synchronous>, transform_indices = @transform_4, window_bounds = array<i64: 24, 32>}, {pipeline_mode = #tpu.pipeline_mode<synchronous>, transform_indices = @transform_5, window_bounds = array<i64: 24, 1>}, {transform_indices = @transform_6, window_bounds = array<i64: 24, 128>}]} {
    %c0 = arith.constant 0 : index
    %c0_0 = arith.constant 0 : index
    %0 = vector.load %arg2[%c0, %c0_0] : memref<24x128xf32, #tpu.memory_space<vmem>>, vector<24x128xf32>
    %c0_1 = arith.constant 0 : index
    %c0_2 = arith.constant 0 : index
    %1 = vector.load %arg3[%c0_1, %c0_2] : memref<24x24xf32, #tpu.memory_space<vmem>>, vector<24x24xf32>
    %c0_3 = arith.constant 0 : index
    %c0_4 = arith.constant 0 : index
    %2 = vector.load %arg4[%c0_3, %c0_4] : memref<24x24xf32, #tpu.memory_space<vmem>>, vector<24x24xf32>
    %c0_5 = arith.constant 0 : index
    %c0_6 = arith.constant 0 : index
    %3 = vector.load %arg1[%c0_5, %c0_6] : memref<32x128xf32, #tpu.memory_space<vmem>>, vector<32x128xf32>
    %cst = arith.constant 0.000000e+00 : f32
    %cst_7 = arith.constant 1.000000e+00 : f32
    %4 = vector.broadcast %cst : f32 to vector<32x128xf32>
    %5 = arith.maximumf %4, %3 : vector<32x128xf32>
    %6 = vector.broadcast %cst_7 : f32 to vector<32x128xf32>
    %7 = arith.minimumf %6, %5 : vector<32x128xf32>
    %c0_8 = arith.constant 0 : index
    %c0_9 = arith.constant 0 : index
    %8 = vector.load %arg5[%c0_8, %c0_9] : memref<24x32xf32, #tpu.memory_space<vmem>>, vector<24x32xf32>
    %cst_10 = arith.constant dense<0.000000e+00> : vector<24x128xf32>
    %9 = tpu.matmul %8, %7, %cst_10 {dimension_numbers = #tpu.dot_dimension_numbers<[1], [0], [0], [1], [0, 0, 1, 1], [], []>} : vector<24x32xf32>, vector<32x128xf32>, vector<24x128xf32> -> vector<24x128xf32>
    %c0_11 = arith.constant 0 : index
    %c0_12 = arith.constant 0 : index
    %10 = vector.load %arg6[%c0_11, %c0_12] : memref<24x1xf32, #tpu.memory_space<vmem>>, vector<24x1xf32>
    %11 = vector.broadcast %10 : vector<24x1xf32> to vector<24x128xf32>
    %12 = arith.addf %9, %11 : vector<24x128xf32>
    %cst_13 = arith.constant 2.000000e-01 : f32
    %13 = vector.broadcast %cst_13 : f32 to vector<24x128xf32>
    %14 = arith.mulf %13, %12 : vector<24x128xf32>
    %cst_14 = arith.constant 0.000000e+00 : f32
    %cst_15 = arith.constant 1.000000e+00 : f32
    %15 = vector.broadcast %cst_14 : f32 to vector<24x128xf32>
    %16 = arith.maximumf %15, %0 : vector<24x128xf32>
    %17 = vector.broadcast %cst_15 : f32 to vector<24x128xf32>
    %18 = arith.minimumf %17, %16 : vector<24x128xf32>
    %cst_16 = arith.constant dense<0.000000e+00> : vector<24x128xf32>
    %19 = tpu.matmul %1, %18, %cst_16 {dimension_numbers = #tpu.dot_dimension_numbers<[1], [0], [0], [1], [0, 0, 1, 1], [], []>} : vector<24x24xf32>, vector<24x128xf32>, vector<24x128xf32> -> vector<24x128xf32>
    %20 = arith.addf %19, %12 : vector<24x128xf32>
    %cst_17 = arith.constant 0.000000e+00 : f32
    %21 = vector.broadcast %cst_17 : f32 to vector<24x128xf32>
    %22 = arith.cmpf oge, %0, %21 : vector<24x128xf32>
    %cst_18 = arith.constant 1.000000e+00 : f32
    %23 = vector.broadcast %cst_18 : f32 to vector<24x128xf32>
    %24 = arith.cmpf ole, %0, %23 : vector<24x128xf32>
    %25 = arith.andi %22, %24 : vector<24x128xi1>
    %cst_19 = arith.constant 0.000000e+00 : f32
    %26 = vector.broadcast %cst_19 : f32 to vector<24x128xf32>
    %27 = arith.select %25, %20, %26 : vector<24x128xi1>, vector<24x128xf32>
    %28 = arith.subf %27, %0 : vector<24x128xf32>
    %cst_20 = arith.constant 2.000000e-01 : f32
    %29 = vector.broadcast %cst_20 : f32 to vector<24x128xf32>
    %30 = arith.mulf %29, %28 : vector<24x128xf32>
    %31 = arith.addf %0, %30 : vector<24x128xf32>
    %cst_21 = arith.constant 0.000000e+00 : f32
    %cst_22 = arith.constant 1.000000e+00 : f32
    %32 = vector.broadcast %cst_21 : f32 to vector<24x128xf32>
    %33 = arith.maximumf %32, %31 : vector<24x128xf32>
    %34 = vector.broadcast %cst_22 : f32 to vector<24x128xf32>
    %35 = arith.minimumf %34, %33 : vector<24x128xf32>
    %cst_23 = arith.constant dense<0.000000e+00> : vector<24x128xf32>
    %36 = tpu.matmul %2, %35, %cst_23 {dimension_numbers = #tpu.dot_dimension_numbers<[1], [0], [0], [1], [0, 0, 1, 1], [], []>} : vector<24x24xf32>, vector<24x128xf32>, vector<24x128xf32> -> vector<24x128xf32>
    %37 = arith.addf %36, %14 : vector<24x128xf32>
    %cst_24 = arith.constant 0.000000e+00 : f32
    %cst_25 = arith.constant 1.000000e+00 : f32
    %38 = vector.broadcast %cst_24 : f32 to vector<24x128xf32>
    %39 = arith.maximumf %38, %37 : vector<24x128xf32>
    %40 = vector.broadcast %cst_25 : f32 to vector<24x128xf32>
    %41 = arith.minimumf %40, %39 : vector<24x128xf32>
    %cst_26 = arith.constant dense<0.000000e+00> : vector<24x128xf32>
    %42 = tpu.matmul %2, %41, %cst_26 {dimension_numbers = #tpu.dot_dimension_numbers<[1], [0], [0], [1], [0, 0, 1, 1], [], []>} : vector<24x24xf32>, vector<24x128xf32>, vector<24x128xf32> -> vector<24x128xf32>
    %43 = arith.addf %42, %14 : vector<24x128xf32>
    %cst_27 = arith.constant 0.000000e+00 : f32
    %cst_28 = arith.constant 1.000000e+00 : f32
    %44 = vector.broadcast %cst_27 : f32 to vector<24x128xf32>
    %45 = arith.maximumf %44, %43 : vector<24x128xf32>
    %46 = vector.broadcast %cst_28 : f32 to vector<24x128xf32>
    %47 = arith.minimumf %46, %45 : vector<24x128xf32>
    %cst_29 = arith.constant dense<0.000000e+00> : vector<24x128xf32>
    %48 = tpu.matmul %2, %47, %cst_29 {dimension_numbers = #tpu.dot_dimension_numbers<[1], [0], [0], [1], [0, 0, 1, 1], [], []>} : vector<24x24xf32>, vector<24x128xf32>, vector<24x128xf32> -> vector<24x128xf32>
    %49 = arith.addf %48, %14 : vector<24x128xf32>
    %cst_30 = arith.constant 0.000000e+00 : f32
    %cst_31 = arith.constant 1.000000e+00 : f32
    %50 = vector.broadcast %cst_30 : f32 to vector<24x128xf32>
    %51 = arith.maximumf %50, %49 : vector<24x128xf32>
    %52 = vector.broadcast %cst_31 : f32 to vector<24x128xf32>
    %53 = arith.minimumf %52, %51 : vector<24x128xf32>
    %cst_32 = arith.constant dense<0.000000e+00> : vector<24x128xf32>
    %54 = tpu.matmul %2, %53, %cst_32 {dimension_numbers = #tpu.dot_dimension_numbers<[1], [0], [0], [1], [0, 0, 1, 1], [], []>} : vector<24x24xf32>, vector<24x128xf32>, vector<24x128xf32> -> vector<24x128xf32>
    %55 = arith.addf %54, %14 : vector<24x128xf32>
    %cst_33 = arith.constant 0.000000e+00 : f32
    %cst_34 = arith.constant 1.000000e+00 : f32
    %56 = vector.broadcast %cst_33 : f32 to vector<24x128xf32>
    %57 = arith.maximumf %56, %55 : vector<24x128xf32>
    %58 = vector.broadcast %cst_34 : f32 to vector<24x128xf32>
    %59 = arith.minimumf %58, %57 : vector<24x128xf32>
    %cst_35 = arith.constant dense<0.000000e+00> : vector<24x128xf32>
    %60 = tpu.matmul %2, %59, %cst_35 {dimension_numbers = #tpu.dot_dimension_numbers<[1], [0], [0], [1], [0, 0, 1, 1], [], []>} : vector<24x24xf32>, vector<24x128xf32>, vector<24x128xf32> -> vector<24x128xf32>
    %61 = arith.addf %60, %14 : vector<24x128xf32>
    %cst_36 = arith.constant 0.000000e+00 : f32
    %cst_37 = arith.constant 1.000000e+00 : f32
    %62 = vector.broadcast %cst_36 : f32 to vector<24x128xf32>
    %63 = arith.maximumf %62, %61 : vector<24x128xf32>
    %64 = vector.broadcast %cst_37 : f32 to vector<24x128xf32>
    %65 = arith.minimumf %64, %63 : vector<24x128xf32>
    %cst_38 = arith.constant dense<0.000000e+00> : vector<24x128xf32>
    %66 = tpu.matmul %2, %65, %cst_38 {dimension_numbers = #tpu.dot_dimension_numbers<[1], [0], [0], [1], [0, 0, 1, 1], [], []>} : vector<24x24xf32>, vector<24x128xf32>, vector<24x128xf32> -> vector<24x128xf32>
    %67 = arith.addf %66, %14 : vector<24x128xf32>
    %cst_39 = arith.constant 0.000000e+00 : f32
    %cst_40 = arith.constant 1.000000e+00 : f32
    %68 = vector.broadcast %cst_39 : f32 to vector<24x128xf32>
    %69 = arith.maximumf %68, %67 : vector<24x128xf32>
    %70 = vector.broadcast %cst_40 : f32 to vector<24x128xf32>
    %71 = arith.minimumf %70, %69 : vector<24x128xf32>
    %cst_41 = arith.constant dense<0.000000e+00> : vector<24x128xf32>
    %72 = tpu.matmul %2, %71, %cst_41 {dimension_numbers = #tpu.dot_dimension_numbers<[1], [0], [0], [1], [0, 0, 1, 1], [], []>} : vector<24x24xf32>, vector<24x128xf32>, vector<24x128xf32> -> vector<24x128xf32>
    %73 = arith.addf %72, %14 : vector<24x128xf32>
    %cst_42 = arith.constant 0.000000e+00 : f32
    %cst_43 = arith.constant 1.000000e+00 : f32
    %74 = vector.broadcast %cst_42 : f32 to vector<24x128xf32>
    %75 = arith.maximumf %74, %73 : vector<24x128xf32>
    %76 = vector.broadcast %cst_43 : f32 to vector<24x128xf32>
    %77 = arith.minimumf %76, %75 : vector<24x128xf32>
    %cst_44 = arith.constant dense<0.000000e+00> : vector<24x128xf32>
    %78 = tpu.matmul %2, %77, %cst_44 {dimension_numbers = #tpu.dot_dimension_numbers<[1], [0], [0], [1], [0, 0, 1, 1], [], []>} : vector<24x24xf32>, vector<24x128xf32>, vector<24x128xf32> -> vector<24x128xf32>
    %79 = arith.addf %78, %14 : vector<24x128xf32>
    %cst_45 = arith.constant 0.000000e+00 : f32
    %cst_46 = arith.constant 1.000000e+00 : f32
    %80 = vector.broadcast %cst_45 : f32 to vector<24x128xf32>
    %81 = arith.maximumf %80, %79 : vector<24x128xf32>
    %82 = vector.broadcast %cst_46 : f32 to vector<24x128xf32>
    %83 = arith.minimumf %82, %81 : vector<24x128xf32>
    %cst_47 = arith.constant dense<0.000000e+00> : vector<24x128xf32>
    %84 = tpu.matmul %2, %83, %cst_47 {dimension_numbers = #tpu.dot_dimension_numbers<[1], [0], [0], [1], [0, 0, 1, 1], [], []>} : vector<24x24xf32>, vector<24x128xf32>, vector<24x128xf32> -> vector<24x128xf32>
    %85 = arith.addf %84, %14 : vector<24x128xf32>
    %cst_48 = arith.constant 0.000000e+00 : f32
    %cst_49 = arith.constant 1.000000e+00 : f32
    %86 = vector.broadcast %cst_48 : f32 to vector<24x128xf32>
    %87 = arith.maximumf %86, %85 : vector<24x128xf32>
    %88 = vector.broadcast %cst_49 : f32 to vector<24x128xf32>
    %89 = arith.minimumf %88, %87 : vector<24x128xf32>
    %cst_50 = arith.constant dense<0.000000e+00> : vector<24x128xf32>
    %90 = tpu.matmul %2, %89, %cst_50 {dimension_numbers = #tpu.dot_dimension_numbers<[1], [0], [0], [1], [0, 0, 1, 1], [], []>} : vector<24x24xf32>, vector<24x128xf32>, vector<24x128xf32> -> vector<24x128xf32>
    %91 = arith.addf %90, %14 : vector<24x128xf32>
    %cst_51 = arith.constant 0.000000e+00 : f32
    %cst_52 = arith.constant 1.000000e+00 : f32
    %92 = vector.broadcast %cst_51 : f32 to vector<24x128xf32>
    %93 = arith.maximumf %92, %91 : vector<24x128xf32>
    %94 = vector.broadcast %cst_52 : f32 to vector<24x128xf32>
    %95 = arith.minimumf %94, %93 : vector<24x128xf32>
    %cst_53 = arith.constant dense<0.000000e+00> : vector<24x128xf32>
    %96 = tpu.matmul %2, %95, %cst_53 {dimension_numbers = #tpu.dot_dimension_numbers<[1], [0], [0], [1], [0, 0, 1, 1], [], []>} : vector<24x24xf32>, vector<24x128xf32>, vector<24x128xf32> -> vector<24x128xf32>
    %97 = arith.addf %96, %14 : vector<24x128xf32>
    %cst_54 = arith.constant 0.000000e+00 : f32
    %cst_55 = arith.constant 1.000000e+00 : f32
    %98 = vector.broadcast %cst_54 : f32 to vector<24x128xf32>
    %99 = arith.maximumf %98, %97 : vector<24x128xf32>
    %100 = vector.broadcast %cst_55 : f32 to vector<24x128xf32>
    %101 = arith.minimumf %100, %99 : vector<24x128xf32>
    %cst_56 = arith.constant dense<0.000000e+00> : vector<24x128xf32>
    %102 = tpu.matmul %2, %101, %cst_56 {dimension_numbers = #tpu.dot_dimension_numbers<[1], [0], [0], [1], [0, 0, 1, 1], [], []>} : vector<24x24xf32>, vector<24x128xf32>, vector<24x128xf32> -> vector<24x128xf32>
    %103 = arith.addf %102, %14 : vector<24x128xf32>
    %cst_57 = arith.constant 0.000000e+00 : f32
    %cst_58 = arith.constant 1.000000e+00 : f32
    %104 = vector.broadcast %cst_57 : f32 to vector<24x128xf32>
    %105 = arith.maximumf %104, %103 : vector<24x128xf32>
    %106 = vector.broadcast %cst_58 : f32 to vector<24x128xf32>
    %107 = arith.minimumf %106, %105 : vector<24x128xf32>
    %cst_59 = arith.constant dense<0.000000e+00> : vector<24x128xf32>
    %108 = tpu.matmul %2, %107, %cst_59 {dimension_numbers = #tpu.dot_dimension_numbers<[1], [0], [0], [1], [0, 0, 1, 1], [], []>} : vector<24x24xf32>, vector<24x128xf32>, vector<24x128xf32> -> vector<24x128xf32>
    %109 = arith.addf %108, %14 : vector<24x128xf32>
    %cst_60 = arith.constant 0.000000e+00 : f32
    %cst_61 = arith.constant 1.000000e+00 : f32
    %110 = vector.broadcast %cst_60 : f32 to vector<24x128xf32>
    %111 = arith.maximumf %110, %109 : vector<24x128xf32>
    %112 = vector.broadcast %cst_61 : f32 to vector<24x128xf32>
    %113 = arith.minimumf %112, %111 : vector<24x128xf32>
    %cst_62 = arith.constant dense<0.000000e+00> : vector<24x128xf32>
    %114 = tpu.matmul %2, %113, %cst_62 {dimension_numbers = #tpu.dot_dimension_numbers<[1], [0], [0], [1], [0, 0, 1, 1], [], []>} : vector<24x24xf32>, vector<24x128xf32>, vector<24x128xf32> -> vector<24x128xf32>
    %115 = arith.addf %114, %14 : vector<24x128xf32>
    %cst_63 = arith.constant 0.000000e+00 : f32
    %cst_64 = arith.constant 1.000000e+00 : f32
    %116 = vector.broadcast %cst_63 : f32 to vector<24x128xf32>
    %117 = arith.maximumf %116, %115 : vector<24x128xf32>
    %118 = vector.broadcast %cst_64 : f32 to vector<24x128xf32>
    %119 = arith.minimumf %118, %117 : vector<24x128xf32>
    %c0_65 = arith.constant 0 : index
    %c0_66 = arith.constant 0 : index
    %120 = vector.load %arg7[%c0_65, %c0_66] : memref<24x128xf32, #tpu.memory_space<vmem>>, vector<24x128xf32>
    tpu.vector_store %arg7[%c0_65, %c0_66], %119 {strides = array<i32>} : memref<24x128xf32, #tpu.memory_space<vmem>>, vector<24x128xf32>,
    return
  }
  func.func @transform_0(%arg0: i32) -> (i32, i32) {
    %c0_i32 = arith.constant 0 : i32
    %c0_i32_0 = arith.constant 0 : i32
    return %c0_i32, %arg0 : i32, i32
  }
  func.func @transform_1(%arg0: i32) -> (i32, i32) {
    %c0_i32 = arith.constant 0 : i32
    %c0_i32_0 = arith.constant 0 : i32
    return %c0_i32, %arg0 : i32, i32
  }
  func.func @transform_2(%arg0: i32) -> (i32, i32) {
    %c0_i32 = arith.constant 0 : i32
    %c0_i32_0 = arith.constant 0 : i32
    %c0_i32_1 = arith.constant 0 : i32
    return %c0_i32, %c0_i32_0 : i32, i32
  }
  func.func @transform_3(%arg0: i32) -> (i32, i32) {
    %c0_i32 = arith.constant 0 : i32
    %c0_i32_0 = arith.constant 0 : i32
    %c0_i32_1 = arith.constant 0 : i32
    return %c0_i32, %c0_i32_0 : i32, i32
  }
  func.func @transform_4(%arg0: i32) -> (i32, i32) {
    %c0_i32 = arith.constant 0 : i32
    %c0_i32_0 = arith.constant 0 : i32
    %c0_i32_1 = arith.constant 0 : i32
    return %c0_i32, %c0_i32_0 : i32, i32
  }
  func.func @transform_5(%arg0: i32) -> (i32, i32) {
    %c0_i32 = arith.constant 0 : i32
    %c0_i32_0 = arith.constant 0 : i32
    %c0_i32_1 = arith.constant 0 : i32
    return %c0_i32, %c0_i32_0 : i32, i32
  }
  func.func @transform_6(%arg0: i32) -> (i32, i32) {
    %c0_i32 = arith.constant 0 : i32
    %c0_i32_0 = arith.constant 0 : i32
    return %c0_i32, %arg0 : i32, i32
  }
}

</mosaic_0001>

<llo_original>
// kernel: tpu_custom_call.1
$region0: #{tpu_custom_call.1}
  #allocation0 [shape = 'u32[]', space=smem, size = 0x4, offset = 0x4, fixed_abs, tag = 'smem constant byte address 0x4 - core index']
  #allocation1 [shape = 'u32[144,128]{1,0:T(1,128)}', space=vmem, size = 0x12000, scoped, tag = 'internal scratch']
  %s0 = inlined_call_operand.vmem [shape: f32[32,128], index: 0, kind: input, shape index: {}]
  %s1 = inlined_call_operand.hbm [shape: f32[24,128], index: 1, kind: input, shape index: {}, may-alias: {1,6}]
  %s2 = inlined_call_operand.vmem [shape: f32[24,24], index: 2, kind: input, shape index: {}]
  %s3 = inlined_call_operand.vmem [shape: f32[24,24], index: 3, kind: input, shape index: {}]
  %s4 = inlined_call_operand.hbm [shape: f32[24,32], index: 4, kind: input, shape index: {}]
  %s5 = inlined_call_operand.vmem [shape: f32[24,1], index: 5, kind: input, shape index: {}]
  %s6 = inlined_call_operand.hbm [shape: f32[24,128], index: 6, kind: output, shape index: {}, may-alias: {1,6}]
  %s7 = sld [smem:[#allocation0]]
  $region42: #{tpu_custom_call.1} parent=0
    _
  %s9 = ssub.s32 1, %s7
  %s10 = scalar_select 0, %s9, %s7
  $region1: #{tpu_custom_call.1} parent=0
    #allocation2 [shape = 'u8[12288]{0}', space=vmem, size = 0x3000, scoped, tag = 'input window, operand 1, single buffered']
    #allocation3 [shape = 's32[1]{0}', space=sflag, size = 0x4, scoped, tag = 'scoped memory for tpu_custom_call.1']
    #allocation4 [shape = 's32[1]{0}', space=sflag, size = 0x4, scoped, tag = 'scoped memory for tpu_custom_call.1']
    #allocation5 [shape = 'u8[12288]{0}', space=vmem, size = 0x3000, scoped, tag = 'input window, operand 4, single buffered']
    #allocation6 [shape = 's32[1]{0}', space=sflag, size = 0x4, scoped, tag = 'scoped memory for tpu_custom_call.1']
    #allocation7 [shape = 'u8[12288]{0}', space=vmem, size = 0x3000, scoped, tag = 'output window, operand 0, single buffered']
    %11 = vsyncpa [#allocation3], 0
    %12 = vsyncpa [#allocation6], 0
    %13 = vsyncpa [#allocation4], 0
    // Predicated region
    $region2: #{tpu_custom_call.1} parent=1 // pred_check
      _
    $region3: #{tpu_custom_call.1} parent=1 // pred_check_branch
      %15 = sbr.rel (0) target = $region5
    $region4: #{tpu_custom_call.1} parent=1 // pred_region
      _
    $region5: #{tpu_custom_call.1} parent=1 // pred_fallthru
      _
    // Predicated region
    $region6: #{tpu_custom_call.1} parent=1 // pred_check
      _
    $region7: #{tpu_custom_call.1} parent=1 // pred_check_branch
      %17 = sbr.rel (0) target = $region9
    $region8: #{tpu_custom_call.1} parent=1 // pred_region
      %s19 = ssub.s32 384, 384
      %20 = vsyncadd [#allocation3], %s19
      %s21 = sshll.u32 [#allocation2], 4
      %s22 = int_to_ptr.vmem [resolvable:$true] %s21
      %27 = dma.hbm_to_vmem [thread:$0]  %s1, 384, %s22, [#allocation3], 128, 128, 8
    $region9: #{tpu_custom_call.1} parent=1 // pred_fallthru
      _
    // Predicated region
    $region10: #{tpu_custom_call.1} parent=1 // pred_check
      _
    $region11: #{tpu_custom_call.1} parent=1 // pred_check_branch
      %29 = sbr.rel (0) target = $region13
    $region12: #{tpu_custom_call.1} parent=1 // pred_region
      _
    $region13: #{tpu_custom_call.1} parent=1 // pred_fallthru
      _
    // Predicated region
    $region14: #{tpu_custom_call.1} parent=1 // pred_check
      _
    $region15: #{tpu_custom_call.1} parent=1 // pred_check_branch
      %31 = sbr.rel (0) target = $region17
    $region16: #{tpu_custom_call.1} parent=1 // pred_region
      _
    $region17: #{tpu_custom_call.1} parent=1 // pred_fallthru
      _
    // Predicated region
    $region18: #{tpu_custom_call.1} parent=1 // pred_check
      _
    $region19: #{tpu_custom_call.1} parent=1 // pred_check_branch
      %33 = sbr.rel (0) target = $region21
    $region20: #{tpu_custom_call.1} parent=1 // pred_region
      %s35 = ssub.s32 384, 384
      %36 = vsyncadd [#allocation6], %s35
      %s37 = sshll.u32 [#allocation5], 4
      %s38 = int_to_ptr.vmem [resolvable:$true] %s37
      %43 = dma.hbm_to_vmem [thread:$0]  %s4, 384, %s38, [#allocation6], 128, 128, 8
    $region21: #{tpu_custom_call.1} parent=1 // pred_fallthru
      _
    // Predicated region
    $region22: #{tpu_custom_call.1} parent=1 // pred_check
      _
    $region23: #{tpu_custom_call.1} parent=1 // pred_check_branch
      %45 = sbr.rel (0) target = $region25
    $region24: #{tpu_custom_call.1} parent=1 // pred_region
      _
    $region25: #{tpu_custom_call.1} parent=1 // pred_fallthru
      _
    // Predicated region
    $region26: #{tpu_custom_call.1} parent=1 // pred_check
      _
    $region27: #{tpu_custom_call.1} parent=1 // pred_check_branch
      %47 = sbr.rel (0) target = $region29
    $region28: #{tpu_custom_call.1} parent=1 // pred_region
      %48 = dma.done [#allocation3], 384
    $region29: #{tpu_custom_call.1} parent=1 // pred_fallthru
      _
    // Predicated region
    $region30: #{tpu_custom_call.1} parent=1 // pred_check
      _
    $region31: #{tpu_custom_call.1} parent=1 // pred_check_branch
      %50 = sbr.rel (0) target = $region33
    $region32: #{tpu_custom_call.1} parent=1 // pred_region
      %51 = dma.done [#allocation6], 384
    $region33: #{tpu_custom_call.1} parent=1 // pred_fallthru
      _
    %v52 = vld [vmem:[#allocation2] sm:$0xff]
    %v53 = vld [vmem:[#allocation2 + $0x8] sm:$0xff]
    %v54 = vld [vmem:[#allocation2 + $0x10] sm:$0xff]
    %v55 = vld [vmem:[%s2] sm:$0xff]
    %v56 = vld [vmem:[%s2 + $0x8] sm:$0xff]
    %v57 = vld [vmem:[%s2 + $0x10] sm:$0xff]
    %v58 = vld [vmem:[%s3] sm:$0xff]
    %v59 = vld [vmem:[%s3 + $0x8] sm:$0xff]
    %v60 = vld [vmem:[%s3 + $0x10] sm:$0xff]
    %v61 = vld [vmem:[%s0] sm:$0xff]
    %v62 = vld [vmem:[%s0 + $0x8] sm:$0xff]
    %v63 = vld [vmem:[%s0 + $0x10] sm:$0xff]
    %v64 = vld [vmem:[%s0 + $0x18] sm:$0xff]
    %v65 = vmax.f32 %v61, 0.0
    %v66 = vmax.f32 %v62, 0.0
    %v67 = vmax.f32 %v63, 0.0
    %v68 = vmax.f32 %v64, 0.0
    %v69 = vmin.f32 %v65, 1.0
    %v70 = vmin.f32 %v66, 1.0
    %v71 = vmin.f32 %v67, 1.0
    %v72 = vmin.f32 %v68, 1.0
    %v73 = vld [vmem:[#allocation5] sm:$0xff]
    %v74 = vld [vmem:[#allocation5 + $0x8] sm:$0xff]
    %v75 = vld [vmem:[#allocation5 + $0x10] sm:$0xff]
    %v76 = vld [vmem:[%s5] sm:$0xff]
    %v77 = vld [vmem:[%s5 + $0x8] sm:$0xff]
    %v78 = vld [vmem:[%s5 + $0x10] sm:$0xff]
    %80 = vset.pattern.permute.xlu0 0
    %81 = vperm.xlu0 %80, %v76
    %v82 = vpop.permute.xlu0 %81
    %85 = vset.pattern.permute.xlu0 0
    %86 = vperm.xlu0 %85, %v77
    %v87 = vpop.permute.xlu0 %86
    %90 = vset.pattern.permute.xlu0 0
    %91 = vperm.xlu0 %90, %v78
    %v92 = vpop.permute.xlu0 %91
    %vm94 = vcmask 261120
    %v96 = vsel %vm94, %v73, 0
    %v99 = vsel %vm94, %v74, 0
    %v102 = vsel %vm94, %v75, 0
    %104 = vmatprep.subr.mxu0 0.0
    %105 = vmatpush1.msra.mxu0 %v69
    %106 = vmatprep.subr.mxu0 0.0
    %107 = vmatpush1.msra.mxu0 %v70
    %108 = vmatprep.subr.mxu0 0.0
    %109 = vmatpush1.msra.mxu0 %v71
    %110 = vmatprep.subr.mxu0 0.0
    %111 = vmatpush1.msra.mxu0 %v72
    %112 = vmatprep.subr.mxu0 0.0
    %113 = vmatpush1.msra.mxu0 0.0
    %114 = vmatprep.subr.mxu0 0.0
    %115 = vmatpush1.msra.mxu0 0.0
    %116 = vmatprep.subr.mxu0 0.0
    %117 = vmatpush1.msra.mxu0 0.0
    %118 = vmatprep.subr.mxu0 0.0
    %119 = vmatpush1.msra.mxu0 0.0
    %120 = vmatprep.subr.mxu0 0.0
    %121 = vmatpush1.msra.mxu0 0.0
    %122 = vmatprep.subr.mxu0 0.0
    %123 = vmatpush1.msra.mxu0 0.0
    %124 = vmatprep.subr.mxu0 0.0
    %125 = vmatpush1.msra.mxu0 0.0
    %126 = vmatprep.subr.mxu0 0.0
    %127 = vmatpush1.msra.mxu0 0.0
    %128 = vmatprep.subr.mxu0 0.0
    %129 = vmatpush1.msra.mxu0 0.0
    %130 = vmatprep.subr.mxu0 0.0
    %131 = vmatpush1.msra.mxu0 0.0
    %132 = vmatprep.subr.mxu0 0.0
    %133 = vmatpush1.msra.mxu0 0.0
    %134 = vmatprep.subr.mxu0 0.0
    %135 = vmatpush1.msra.mxu0 0.0
    %136 = vmatprep.subr.mxu0 0.0
    %137 = vmatpush1.msra.mxu0 0.0
    %138 = vmatprep.subr.mxu0 0.0
    %139 = vmatpush1.msra.mxu0 0.0
    %140 = vmatprep.subr.mxu0 0.0
    %141 = vmatpush1.msra.mxu0 0.0
    %142 = vmatprep.subr.mxu0 0.0
    %143 = vmatpush1.msra.mxu0 0.0
    %144 = vmatprep.subr.mxu0 0.0
    %145 = vmatpush1.msra.mxu0 0.0
    %146 = vmatprep.subr.mxu0 0.0
    %147 = vmatpush1.msra.mxu0 0.0
    %148 = vmatprep.subr.mxu0 0.0
    %149 = vmatpush1.msra.mxu0 0.0
    %150 = vmatprep.subr.mxu0 0.0
    %151 = vmatpush1.msra.mxu0 0.0
    %152 = vmatprep.subr.mxu0 0.0
    %153 = vmatpush1.msra.mxu0 0.0
    %154 = vmatprep.subr.mxu0 0.0
    %155 = vmatpush1.msra.mxu0 0.0
    %156 = vmatprep.subr.mxu0 0.0
    %157 = vmatpush1.msra.mxu0 0.0
    %158 = vmatprep.subr.mxu0 0.0
    %159 = vmatpush1.msra.mxu0 0.0
    %160 = vmatprep.subr.mxu0 0.0
    %161 = vmatpush1.msra.mxu0 0.0
    %162 = vmatprep.subr.mxu0 0.0
    %163 = vmatpush1.msra.mxu0 0.0
    %164 = vmatprep.subr.mxu0 0.0
    %165 = vmatpush1.msra.mxu0 0.0
    %166 = vmatprep.subr.mxu0 0.0
    %167 = vmatpush1.msra.mxu0 0.0
    %168 = vmatprep.mubr.f32.mxu0 0.0
    %169 = vmatmul.mubr.f32.gmra.mrb[0].mxu0 %v96
    %v170 = vpop.f32.mrb[0].mxu0
    %v171 = vadd.f32 %v82, %v170
    %v172 = vpop.f32.mrb[0].mxu0
    %173 = vmatprep.mubr.f32.mxu0 0.0
    %174 = vmatmul.mubr.f32.gmra.mrb[0].mxu0 %v99
    %v175 = vpop.f32.mrb[0].mxu0
    %v176 = vadd.f32 %v87, %v175
    %v177 = vpop.f32.mrb[0].mxu0
    %178 = vmatprep.mubr.f32.mxu0 0.0
    %179 = vmatmul.mubr.f32.gmra.mrb[0].mxu0 %v102
    %v180 = vpop.f32.mrb[0].mxu0
    %v181 = vadd.f32 %v92, %v180
    %v182 = vpop.f32.mrb[0].mxu0
    %183 = vdwg.mxu0
    %v184 = vmul.f32 %v171, 0.2
    %v185 = vmul.f32 %v176, 0.2
    %v186 = vmul.f32 %v181, 0.2
    %v187 = vmax.f32 %v52, 0.0
    %v188 = vmax.f32 %v53, 0.0
    %v189 = vmax.f32 %v54, 0.0
    %v190 = vmin.f32 %v187, 1.0
    %v191 = vmin.f32 %v188, 1.0
    %v192 = vmin.f32 %v189, 1.0
    %vm193 = vcmask 195584
    %v195 = vsel %vm193, %v55, 0
    %v198 = vsel %vm193, %v56, 0
    %v201 = vsel %vm193, %v57, 0
    %203 = vmatprep.subr.mxu0 0.0
    %204 = vmatpush1.msra.mxu0 %v190
    %205 = vmatprep.subr.mxu0 0.0
    %206 = vmatpush1.msra.mxu0 %v191
    %207 = vmatprep.subr.mxu0 0.0
    %208 = vmatpush1.msra.mxu0 %v192
    %209 = vmatprep.subr.mxu0 0.0
    %210 = vmatpush1.msra.mxu0 0.0
    %211 = vmatprep.subr.mxu0 0.0
    %212 = vmatpush1.msra.mxu0 0.0
    %213 = vmatprep.subr.mxu0 0.0
    %214 = vmatpush1.msra.mxu0 0.0
    %215 = vmatprep.subr.mxu0 0.0
    %216 = vmatpush1.msra.mxu0 0.0
    %217 = vmatprep.subr.mxu0 0.0
    %218 = vmatpush1.msra.mxu0 0.0
    %219 = vmatprep.subr.mxu0 0.0
    %220 = vmatpush1.msra.mxu0 0.0
    %221 = vmatprep.subr.mxu0 0.0
    %222 = vmatpush1.msra.mxu0 0.0
    %223 = vmatprep.subr.mxu0 0.0
    %224 = vmatpush1.msra.mxu0 0.0
    %225 = vmatprep.subr.mxu0 0.0
    %226 = vmatpush1.msra.mxu0 0.0
    %227 = vmatprep.subr.mxu0 0.0
    %228 = vmatpush1.msra.mxu0 0.0
    %229 = vmatprep.subr.mxu0 0.0
    %230 = vmatpush1.msra.mxu0 0.0
    %231 = vmatprep.subr.mxu0 0.0
    %232 = vmatpush1.msra.mxu0 0.0
    %233 = vmatprep.subr.mxu0 0.0
    %234 = vmatpush1.msra.mxu0 0.0
    %235 = vmatprep.subr.mxu0 0.0
    %236 = vmatpush1.msra.mxu0 0.0
    %237 = vmatprep.subr.mxu0 0.0
    %238 = vmatpush1.msra.mxu0 0.0
    %239 = vmatprep.subr.mxu0 0.0
    %240 = vmatpush1.msra.mxu0 0.0
    %241 = vmatprep.subr.mxu0 0.0
    %242 = vmatpush1.msra.mxu0 0.0
    %243 = vmatprep.subr.mxu0 0.0
    %244 = vmatpush1.msra.mxu0 0.0
    %245 = vmatprep.subr.mxu0 0.0
    %246 = vmatpush1.msra.mxu0 0.0
    %247 = vmatprep.subr.mxu0 0.0
    %248 = vmatpush1.msra.mxu0 0.0
    %249 = vmatprep.subr.mxu0 0.0
    %250 = vmatpush1.msra.mxu0 0.0
    %251 = vmatprep.subr.mxu0 0.0
    %252 = vmatpush1.msra.mxu0 0.0
    %253 = vmatprep.subr.mxu0 0.0
    %254 = vmatpush1.msra.mxu0 0.0
    %255 = vmatprep.subr.mxu0 0.0
    %256 = vmatpush1.msra.mxu0 0.0
    %257 = vmatprep.subr.mxu0 0.0
    %258 = vmatpush1.msra.mxu0 0.0
    %259 = vmatprep.subr.mxu0 0.0
    %260 = vmatpush1.msra.mxu0 0.0
    %261 = vmatprep.subr.mxu0 0.0
    %262 = vmatpush1.msra.mxu0 0.0
    %263 = vmatprep.subr.mxu0 0.0
    %264 = vmatpush1.msra.mxu0 0.0
    %265 = vmatprep.subr.mxu0 0.0
    %266 = vmatpush1.msra.mxu0 0.0
    %267 = vmatprep.mubr.f32.mxu0 0.0
    %268 = vmatmul.mubr.f32.gmra.mrb[0].mxu0 %v195
    %v269 = vpop.f32.mrb[0].mxu0
    %v270 = vadd.f32 %v171, %v269
    %v271 = vpop.f32.mrb[0].mxu0
    %272 = vmatprep.mubr.f32.mxu0 0.0
    %273 = vmatmul.mubr.f32.gmra.mrb[0].mxu0 %v198
    %v274 = vpop.f32.mrb[0].mxu0
    %v275 = vadd.f32 %v176, %v274
    %v276 = vpop.f32.mrb[0].mxu0
    %277 = vmatprep.mubr.f32.mxu0 0.0
    %278 = vmatmul.mubr.f32.gmra.mrb[0].mxu0 %v201
    %v279 = vpop.f32.mrb[0].mxu0
    %v280 = vadd.f32 %v181, %v279
    %v281 = vpop.f32.mrb[0].mxu0
    %282 = vdwg.mxu0
    %vm283 = vcmp.ge.f32.partialorder %v52, 0.0
    %vm284 = vcmp.ge.f32.partialorder %v53, 0.0
    %vm285 = vcmp.ge.f32.partialorder %v54, 0.0
    %vm286 = vcmp.le.f32.partialorder %v52, 1.0
    %vm287 = vcmp.le.f32.partialorder %v53, 1.0
    %vm288 = vcmp.le.f32.partialorder %v54, 1.0
    %vm289 = vmand %vm283, %vm286
    %vm290 = vmand %vm284, %vm287
    %vm291 = vmand %vm285, %vm288
    %v292 = vsel %vm289, %v270, 0.0
    %v293 = vsel %vm290, %v275, 0.0
    %v294 = vsel %vm291, %v280, 0.0
    %v295 = vsub.f32 %v292, %v52
    %v296 = vsub.f32 %v293, %v53
    %v297 = vsub.f32 %v294, %v54
    %v298 = vmul.f32 %v295, 0.2
    %v299 = vmul.f32 %v296, 0.2
    %v300 = vmul.f32 %v297, 0.2
    %v301 = vadd.f32 %v52, %v298
    %v302 = vadd.f32 %v53, %v299
    %v303 = vadd.f32 %v54, %v300
    %v304 = vmax.f32 %v301, 0.0
    %v305 = vmax.f32 %v302, 0.0
    %v306 = vmax.f32 %v303, 0.0
    %v307 = vmin.f32 %v304, 1.0
    %v308 = vmin.f32 %v305, 1.0
    %v309 = vmin.f32 %v306, 1.0
    %v311 = vsel %vm193, %v58, 0
    %v314 = vsel %vm193, %v59, 0
    %v317 = vsel %vm193, %v60, 0
    %319 = vmatprep.subr.mxu0 0.0
    %320 = vmatpush1.msra.mxu0 %v307
    %321 = vmatprep.subr.mxu0 0.0
    %322 = vmatpush1.msra.mxu0 %v308
    %323 = vmatprep.subr.mxu0 0.0
    %324 = vmatpush1.msra.mxu0 %v309
    %325 = vmatprep.subr.mxu0 0.0
    %326 = vmatpush1.msra.mxu0 0.0
    %327 = vmatprep.subr.mxu0 0.0
    %328 = vmatpush1.msra.mxu0 0.0
    %329 = vmatprep.subr.mxu0 0.0
    %330 = vmatpush1.msra.mxu0 0.0
    %331 = vmatprep.subr.mxu0 0.0
    %332 = vmatpush1.msra.mxu0 0.0
    %333 = vmatprep.subr.mxu0 0.0
    %334 = vmatpush1.msra.mxu0 0.0
    %335 = vmatprep.subr.mxu0 0.0
    %336 = vmatpush1.msra.mxu0 0.0
    %337 = vmatprep.subr.mxu0 0.0
    %338 = vmatpush1.msra.mxu0 0.0
    %339 = vmatprep.subr.mxu0 0.0
    %340 = vmatpush1.msra.mxu0 0.0
    %341 = vmatprep.subr.mxu0 0.0
    %342 = vmatpush1.msra.mxu0 0.0
    %343 = vmatprep.subr.mxu0 0.0
    %344 = vmatpush1.msra.mxu0 0.0
    %345 = vmatprep.subr.mxu0 0.0
    %346 = vmatpush1.msra.mxu0 0.0
    %347 = vmatprep.subr.mxu0 0.0
    %348 = vmatpush1.msra.mxu0 0.0
    %349 = vmatprep.subr.mxu0 0.0
    %350 = vmatpush1.msra.mxu0 0.0
    %351 = vmatprep.subr.mxu0 0.0
    %352 = vmatpush1.msra.mxu0 0.0
    %353 = vmatprep.subr.mxu0 0.0
    %354 = vmatpush1.msra.mxu0 0.0
    %355 = vmatprep.subr.mxu0 0.0
    %356 = vmatpush1.msra.mxu0 0.0
    %357 = vmatprep.subr.mxu0 0.0
    %358 = vmatpush1.msra.mxu0 0.0
    %359 = vmatprep.subr.mxu0 0.0
    %360 = vmatpush1.msra.mxu0 0.0
    %361 = vmatprep.subr.mxu0 0.0
    %362 = vmatpush1.msra.mxu0 0.0
    %363 = vmatprep.subr.mxu0 0.0
    %364 = vmatpush1.msra.mxu0 0.0
    %365 = vmatprep.subr.mxu0 0.0
    %366 = vmatpush1.msra.mxu0 0.0
    %367 = vmatprep.subr.mxu0 0.0
    %368 = vmatpush1.msra.mxu0 0.0
    %369 = vmatprep.subr.mxu0 0.0
    %370 = vmatpush1.msra.mxu0 0.0
    %371 = vmatprep.subr.mxu0 0.0
    %372 = vmatpush1.msra.mxu0 0.0
    %373 = vmatprep.subr.mxu0 0.0
    %374 = vmatpush1.msra.mxu0 0.0
    %375 = vmatprep.subr.mxu0 0.0
    %376 = vmatpush1.msra.mxu0 0.0
    %377 = vmatprep.subr.mxu0 0.0
    %378 = vmatpush1.msra.mxu0 0.0
    %379 = vmatprep.subr.mxu0 0.0
    %380 = vmatpush1.msra.mxu0 0.0
    %381 = vmatprep.subr.mxu0 0.0
    %382 = vmatpush1.msra.mxu0 0.0
    %383 = vmatprep.mubr.f32.mxu0 0.0
    %384 = vmatmul.mubr.f32.gmra.mrb[0].mxu0 %v311
    %v385 = vpop.f32.mrb[0].mxu0
    %v386 = vadd.f32 %v184, %v385
    %v387 = vpop.f32.mrb[0].mxu0
    %388 = vmatprep.mubr.f32.mxu0 0.0
    %389 = vmatmul.mubr.f32.gmra.mrb[0].mxu0 %v314
    %v390 = vpop.f32.mrb[0].mxu0
    %v391 = vadd.f32 %v185, %v390
    %v392 = vpop.f32.mrb[0].mxu0
    %393 = vmatprep.mubr.f32.mxu0 0.0
    %394 = vmatmul.mubr.f32.gmra.mrb[0].mxu0 %v317
    %v395 = vpop.f32.mrb[0].mxu0
    %v396 = vadd.f32 %v186, %v395
    %v397 = vpop.f32.mrb[0].mxu0
    %398 = vdwg.mxu0
    %v399 = vmax.f32 %v386, 0.0
    %v400 = vmax.f32 %v391, 0.0
    %v401 = vmax.f32 %v396, 0.0
    %v402 = vmin.f32 %v399, 1.0
    %v403 = vmin.f32 %v400, 1.0
    %v404 = vmin.f32 %v401, 1.0
    %405 = vmatprep.subr.mxu0 0.0
    %406 = vmatpush1.msra.mxu0 %v402
    %407 = vmatprep.subr.mxu0 0.0
    %408 = vmatpush1.msra.mxu0 %v403
    %409 = vmatprep.subr.mxu0 0.0
    %410 = vmatpush1.msra.mxu0 %v404
    %411 = vmatprep.subr.mxu0 0.0
    %412 = vmatpush1.msra.mxu0 0.0
    %413 = vmatprep.subr.mxu0 0.0
    %414 = vmatpush1.msra.mxu0 0.0
    %415 = vmatprep.subr.mxu0 0.0
    %416 = vmatpush1.msra.mxu0 0.0
    %417 = vmatprep.subr.mxu0 0.0
    %418 = vmatpush1.msra.mxu0 0.0
    %419 = vmatprep.subr.mxu0 0.0
    %420 = vmatpush1.msra.mxu0 0.0
    %421 = vmatprep.subr.mxu0 0.0
    %422 = vmatpush1.msra.mxu0 0.0
    %423 = vmatprep.subr.mxu0 0.0
    %424 = vmatpush1.msra.mxu0 0.0
    %425 = vmatprep.subr.mxu0 0.0
    %426 = vmatpush1.msra.mxu0 0.0
    %427 = vmatprep.subr.mxu0 0.0
    %428 = vmatpush1.msra.mxu0 0.0
    %429 = vmatprep.subr.mxu0 0.0
    %430 = vmatpush1.msra.mxu0 0.0
    %431 = vmatprep.subr.mxu0 0.0
    %432 = vmatpush1.msra.mxu0 0.0
    %433 = vmatprep.subr.mxu0 0.0
    %434 = vmatpush1.msra.mxu0 0.0
    %435 = vmatprep.subr.mxu0 0.0
    %436 = vmatpush1.msra.mxu0 0.0
    %437 = vmatprep.subr.mxu0 0.0
    %438 = vmatpush1.msra.mxu0 0.0
    %439 = vmatprep.subr.mxu0 0.0
    %440 = vmatpush1.msra.mxu0 0.0
    %441 = vmatprep.subr.mxu0 0.0
    %442 = vmatpush1.msra.mxu0 0.0
    %443 = vmatprep.subr.mxu0 0.0
    %444 = vmatpush1.msra.mxu0 0.0
    %445 = vmatprep.subr.mxu0 0.0
    %446 = vmatpush1.msra.mxu0 0.0
    %447 = vmatprep.subr.mxu0 0.0
    %448 = vmatpush1.msra.mxu0 0.0
    %449 = vmatprep.subr.mxu0 0.0
    %450 = vmatpush1.msra.mxu0 0.0
    %451 = vmatprep.subr.mxu0 0.0
    %452 = vmatpush1.msra.mxu0 0.0
    %453 = vmatprep.subr.mxu0 0.0
    %454 = vmatpush1.msra.mxu0 0.0
    %455 = vmatprep.subr.mxu0 0.0
    %456 = vmatpush1.msra.mxu0 0.0
    %457 = vmatprep.subr.mxu0 0.0
    %458 = vmatpush1.msra.mxu0 0.0
    %459 = vmatprep.subr.mxu0 0.0
    %460 = vmatpush1.msra.mxu0 0.0
    %461 = vmatprep.subr.mxu0 0.0
    %462 = vmatpush1.msra.mxu0 0.0
    %463 = vmatprep.subr.mxu0 0.0
    %464 = vmatpush1.msra.mxu0 0.0
    %465 = vmatprep.subr.mxu0 0.0
    %466 = vmatpush1.msra.mxu0 0.0
    %467 = vmatprep.subr.mxu0 0.0
    %468 = vmatpush1.msra.mxu0 0.0
    %469 = vmatprep.mubr.f32.mxu0 0.0
    %470 = vmatmul.mubr.f32.gmra.mrb[0].mxu0 %v311
    %v471 = vpop.f32.mrb[0].mxu0
    %v472 = vadd.f32 %v184, %v471
    %v473 = vpop.f32.mrb[0].mxu0
    %474 = vmatprep.mubr.f32.mxu0 0.0
    %475 = vmatmul.mubr.f32.gmra.mrb[0].mxu0 %v314
    %v476 = vpop.f32.mrb[0].mxu0
    %v477 = vadd.f32 %v185, %v476
    %v478 = vpop.f32.mrb[0].mxu0
    %479 = vmatprep.mubr.f32.mxu0 0.0
    %480 = vmatmul.mubr.f32.gmra.mrb[0].mxu0 %v317
    %v481 = vpop.f32.mrb[0].mxu0
    %v482 = vadd.f32 %v186, %v481
    %v483 = vpop.f32.mrb[0].mxu0
    %484 = vdwg.mxu0
    %v485 = vmax.f32 %v472, 0.0
    %v486 = vmax.f32 %v477, 0.0
    %v487 = vmax.f32 %v482, 0.0
    %v488 = vmin.f32 %v485, 1.0
    %v489 = vmin.f32 %v486, 1.0
    %v490 = vmin.f32 %v487, 1.0
    %491 = vmatprep.subr.mxu0 0.0
    %492 = vmatpush1.msra.mxu0 %v488
    %493 = vmatprep.subr.mxu0 0.0
    %494 = vmatpush1.msra.mxu0 %v489
    %495 = vmatprep.subr.mxu0 0.0
    %496 = vmatpush1.msra.mxu0 %v490
    %497 = vmatprep.subr.mxu0 0.0
    %498 = vmatpush1.msra.mxu0 0.0
    %499 = vmatprep.subr.mxu0 0.0
    %500 = vmatpush1.msra.mxu0 0.0
    %501 = vmatprep.subr.mxu0 0.0
    %502 = vmatpush1.msra.mxu0 0.0
    %503 = vmatprep.subr.mxu0 0.0
    %504 = vmatpush1.msra.mxu0 0.0
    %505 = vmatprep.subr.mxu0 0.0
    %506 = vmatpush1.msra.mxu0 0.0
    %507 = vmatprep.subr.mxu0 0.0
    %508 = vmatpush1.msra.mxu0 0.0
    %509 = vmatprep.subr.mxu0 0.0
    %510 = vmatpush1.msra.mxu0 0.0
    %511 = vmatprep.subr.mxu0 0.0
    %512 = vmatpush1.msra.mxu0 0.0
    %513 = vmatprep.subr.mxu0 0.0
    %514 = vmatpush1.msra.mxu0 0.0
    %515 = vmatprep.subr.mxu0 0.0
    %516 = vmatpush1.msra.mxu0 0.0
    %517 = vmatprep.subr.mxu0 0.0
    %518 = vmatpush1.msra.mxu0 0.0
    %519 = vmatprep.subr.mxu0 0.0
    %520 = vmatpush1.msra.mxu0 0.0
    %521 = vmatprep.subr.mxu0 0.0
    %522 = vmatpush1.msra.mxu0 0.0
    %523 = vmatprep.subr.mxu0 0.0
    %524 = vmatpush1.msra.mxu0 0.0
    %525 = vmatprep.subr.mxu0 0.0
    %526 = vmatpush1.msra.mxu0 0.0
    %527 = vmatprep.subr.mxu0 0.0
    %528 = vmatpush1.msra.mxu0 0.0
    %529 = vmatprep.subr.mxu0 0.0
    %530 = vmatpush1.msra.mxu0 0.0
    %531 = vmatprep.subr.mxu0 0.0
    %532 = vmatpush1.msra.mxu0 0.0
    %533 = vmatprep.subr.mxu0 0.0
    %534 = vmatpush1.msra.mxu0 0.0
    %535 = vmatprep.subr.mxu0 0.0
    %536 = vmatpush1.msra.mxu0 0.0
    %537 = vmatprep.subr.mxu0 0.0
    %538 = vmatpush1.msra.mxu0 0.0
    %539 = vmatprep.subr.mxu0 0.0
    %540 = vmatpush1.msra.mxu0 0.0
    %541 = vmatprep.subr.mxu0 0.0
    %542 = vmatpush1.msra.mxu0 0.0
    %543 = vmatprep.subr.mxu0 0.0
    %544 = vmatpush1.msra.mxu0 0.0
    %545 = vmatprep.subr.mxu0 0.0
    %546 = vmatpush1.msra.mxu0 0.0
    %547 = vmatprep.subr.mxu0 0.0
    %548 = vmatpush1.msra.mxu0 0.0
    %549 = vmatprep.subr.mxu0 0.0
    %550 = vmatpush1.msra.mxu0 0.0
    %551 = vmatprep.subr.mxu0 0.0
    %552 = vmatpush1.msra.mxu0 0.0
    %553 = vmatprep.subr.mxu0 0.0
    %554 = vmatpush1.msra.mxu0 0.0
    %555 = vmatprep.mubr.f32.mxu0 0.0
    %556 = vmatmul.mubr.f32.gmra.mrb[0].mxu0 %v311
    %v557 = vpop.f32.mrb[0].mxu0
    %v558 = vadd.f32 %v184, %v557
    %v559 = vpop.f32.mrb[0].mxu0
    %560 = vmatprep.mubr.f32.mxu0 0.0
    %561 = vmatmul.mubr.f32.gmra.mrb[0].mxu0 %v314
    %v562 = vpop.f32.mrb[0].mxu0
    %v563 = vadd.f32 %v185, %v562
    %v564 = vpop.f32.mrb[0].mxu0
    %565 = vmatprep.mubr.f32.mxu0 0.0
    %566 = vmatmul.mubr.f32.gmra.mrb[0].mxu0 %v317
    %v567 = vpop.f32.mrb[0].mxu0
    %v568 = vadd.f32 %v186, %v567
    %v569 = vpop.f32.mrb[0].mxu0
    %570 = vdwg.mxu0
    %v571 = vmax.f32 %v558, 0.0
    %v572 = vmax.f32 %v563, 0.0
    %v573 = vmax.f32 %v568, 0.0
    %v574 = vmin.f32 %v571, 1.0
    %v575 = vmin.f32 %v572, 1.0
    %v576 = vmin.f32 %v573, 1.0
    %577 = vmatprep.subr.mxu0 0.0
    %578 = vmatpush1.msra.mxu0 %v574
    %579 = vmatprep.subr.mxu0 0.0
    %580 = vmatpush1.msra.mxu0 %v575
    %581 = vmatprep.subr.mxu0 0.0
    %582 = vmatpush1.msra.mxu0 %v576
    %583 = vmatprep.subr.mxu0 0.0
    %584 = vmatpush1.msra.mxu0 0.0
    %585 = vmatprep.subr.mxu0 0.0
    %586 = vmatpush1.msra.mxu0 0.0
    %587 = vmatprep.subr.mxu0 0.0
    %588 = vmatpush1.msra.mxu0 0.0
    %589 = vmatprep.subr.mxu0 0.0
    %590 = vmatpush1.msra.mxu0 0.0
    %591 = vmatprep.subr.mxu0 0.0
    %592 = vmatpush1.msra.mxu0 0.0
    %593 = vmatprep.subr.mxu0 0.0
    %594 = vmatpush1.msra.mxu0 0.0
    %595 = vmatprep.subr.mxu0 0.0
    %596 = vmatpush1.msra.mxu0 0.0
    %597 = vmatprep.subr.mxu0 0.0
    %598 = vmatpush1.msra.mxu0 0.0
    %599 = vmatprep.subr.mxu0 0.0
    %600 = vmatpush1.msra.mxu0 0.0
    %601 = vmatprep.subr.mxu0 0.0
    %602 = vmatpush1.msra.mxu0 0.0
    %603 = vmatprep.subr.mxu0 0.0
    %604 = vmatpush1.msra.mxu0 0.0
    %605 = vmatprep.subr.mxu0 0.0
    %606 = vmatpush1.msra.mxu0 0.0
    %607 = vmatprep.subr.mxu0 0.0
    %608 = vmatpush1.msra.mxu0 0.0
    %609 = vmatprep.subr.mxu0 0.0
    %610 = vmatpush1.msra.mxu0 0.0
    %611 = vmatprep.subr.mxu0 0.0
    %612 = vmatpush1.msra.mxu0 0.0
    %613 = vmatprep.subr.mxu0 0.0
    %614 = vmatpush1.msra.mxu0 0.0
    %615 = vmatprep.subr.mxu0 0.0
    %616 = vmatpush1.msra.mxu0 0.0
    %617 = vmatprep.subr.mxu0 0.0
    %618 = vmatpush1.msra.mxu0 0.0
    %619 = vmatprep.subr.mxu0 0.0
    %620 = vmatpush1.msra.mxu0 0.0
    %621 = vmatprep.subr.mxu0 0.0
    %622 = vmatpush1.msra.mxu0 0.0
    %623 = vmatprep.subr.mxu0 0.0
    %624 = vmatpush1.msra.mxu0 0.0
    %625 = vmatprep.subr.mxu0 0.0
    %626 = vmatpush1.msra.mxu0 0.0
    %627 = vmatprep.subr.mxu0 0.0
    %628 = vmatpush1.msra.mxu0 0.0
    %629 = vmatprep.subr.mxu0 0.0
    %630 = vmatpush1.msra.mxu0 0.0
    %631 = vmatprep.subr.mxu0 0.0
    %632 = vmatpush1.msra.mxu0 0.0
    %633 = vmatprep.subr.mxu0 0.0
    %634 = vmatpush1.msra.mxu0 0.0
    %635 = vmatprep.subr.mxu0 0.0
    %636 = vmatpush1.msra.mxu0 0.0
    %637 = vmatprep.subr.mxu0 0.0
    %638 = vmatpush1.msra.mxu0 0.0
    %639 = vmatprep.subr.mxu0 0.0
    %640 = vmatpush1.msra.mxu0 0.0
    %641 = vmatprep.mubr.f32.mxu0 0.0
    %642 = vmatmul.mubr.f32.gmra.mrb[0].mxu0 %v311
    %v643 = vpop.f32.mrb[0].mxu0
    %v644 = vadd.f32 %v184, %v643
    %v645 = vpop.f32.mrb[0].mxu0
    %646 = vmatprep.mubr.f32.mxu0 0.0
    %647 = vmatmul.mubr.f32.gmra.mrb[0].mxu0 %v314
    %v648 = vpop.f32.mrb[0].mxu0
    %v649 = vadd.f32 %v185, %v648
    %v650 = vpop.f32.mrb[0].mxu0
    %651 = vmatprep.mubr.f32.mxu0 0.0
    %652 = vmatmul.mubr.f32.gmra.mrb[0].mxu0 %v317
    %v653 = vpop.f32.mrb[0].mxu0
    %v654 = vadd.f32 %v186, %v653
    %v655 = vpop.f32.mrb[0].mxu0
    %656 = vdwg.mxu0
    %v657 = vmax.f32 %v644, 0.0
    %v658 = vmax.f32 %v649, 0.0
    %v659 = vmax.f32 %v654, 0.0
    %v660 = vmin.f32 %v657, 1.0
    %v661 = vmin.f32 %v658, 1.0
    %v662 = vmin.f32 %v659, 1.0
    %663 = vmatprep.subr.mxu0 0.0
    %664 = vmatpush1.msra.mxu0 %v660
    %665 = vmatprep.subr.mxu0 0.0
    %666 = vmatpush1.msra.mxu0 %v661
    %667 = vmatprep.subr.mxu0 0.0
    %668 = vmatpush1.msra.mxu0 %v662
    %669 = vmatprep.subr.mxu0 0.0
    %670 = vmatpush1.msra.mxu0 0.0
    %671 = vmatprep.subr.mxu0 0.0
    %672 = vmatpush1.msra.mxu0 0.0
    %673 = vmatprep.subr.mxu0 0.0
    %674 = vmatpush1.msra.mxu0 0.0
    %675 = vmatprep.subr.mxu0 0.0
    %676 = vmatpush1.msra.mxu0 0.0
    %677 = vmatprep.subr.mxu0 0.0
    %678 = vmatpush1.msra.mxu0 0.0
    %679 = vmatprep.subr.mxu0 0.0
    %680 = vmatpush1.msra.mxu0 0.0
    %681 = vmatprep.subr.mxu0 0.0
    %682 = vmatpush1.msra.mxu0 0.0
    %683 = vmatprep.subr.mxu0 0.0
    %684 = vmatpush1.msra.mxu0 0.0
    %685 = vmatprep.subr.mxu0 0.0
    %686 = vmatpush1.msra.mxu0 0.0
    %687 = vmatprep.subr.mxu0 0.0
    %688 = vmatpush1.msra.mxu0 0.0
    %689 = vmatprep.subr.mxu0 0.0
    %690 = vmatpush1.msra.mxu0 0.0
    %691 = vmatprep.subr.mxu0 0.0
    %692 = vmatpush1.msra.mxu0 0.0
    %693 = vmatprep.subr.mxu0 0.0
    %694 = vmatpush1.msra.mxu0 0.0
    %695 = vmatprep.subr.mxu0 0.0
    %696 = vmatpush1.msra.mxu0 0.0
    %697 = vmatprep.subr.mxu0 0.0
    %698 = vmatpush1.msra.mxu0 0.0
    %699 = vmatprep.subr.mxu0 0.0
    %700 = vmatpush1.msra.mxu0 0.0
    %701 = vmatprep.subr.mxu0 0.0
    %702 = vmatpush1.msra.mxu0 0.0
    %703 = vmatprep.subr.mxu0 0.0
    %704 = vmatpush1.msra.mxu0 0.0
    %705 = vmatprep.subr.mxu0 0.0
    %706 = vmatpush1.msra.mxu0 0.0
    %707 = vmatprep.subr.mxu0 0.0
    %708 = vmatpush1.msra.mxu0 0.0
    %709 = vmatprep.subr.mxu0 0.0
    %710 = vmatpush1.msra.mxu0 0.0
    %711 = vmatprep.subr.mxu0 0.0
    %712 = vmatpush1.msra.mxu0 0.0
    %713 = vmatprep.subr.mxu0 0.0
    %714 = vmatpush1.msra.mxu0 0.0
    %715 = vmatprep.subr.mxu0 0.0
    %716 = vmatpush1.msra.mxu0 0.0
    %717 = vmatprep.subr.mxu0 0.0
    %718 = vmatpush1.msra.mxu0 0.0
    %719 = vmatprep.subr.mxu0 0.0
    %720 = vmatpush1.msra.mxu0 0.0
    %721 = vmatprep.subr.mxu0 0.0
    %722 = vmatpush1.msra.mxu0 0.0
    %723 = vmatprep.subr.mxu0 0.0
    %724 = vmatpush1.msra.mxu0 0.0
    %725 = vmatprep.subr.mxu0 0.0
    %726 = vmatpush1.msra.mxu0 0.0
    %727 = vmatprep.mubr.f32.mxu0 0.0
    %728 = vmatmul.mubr.f32.gmra.mrb[0].mxu0 %v311
    %v729 = vpop.f32.mrb[0].mxu0
    %v730 = vadd.f32 %v184, %v729
    %v731 = vpop.f32.mrb[0].mxu0
    %732 = vmatprep.mubr.f32.mxu0 0.0
    %733 = vmatmul.mubr.f32.gmra.mrb[0].mxu0 %v314
    %v734 = vpop.f32.mrb[0].mxu0
    %v735 = vadd.f32 %v185, %v734
    %v736 = vpop.f32.mrb[0].mxu0
    %737 = vmatprep.mubr.f32.mxu0 0.0
    %738 = vmatmul.mubr.f32.gmra.mrb[0].mxu0 %v317
    %v739 = vpop.f32.mrb[0].mxu0
    %v740 = vadd.f32 %v186, %v739
    %v741 = vpop.f32.mrb[0].mxu0
    %742 = vdwg.mxu0
    %v743 = vmax.f32 %v730, 0.0
    %v744 = vmax.f32 %v735, 0.0
    %v745 = vmax.f32 %v740, 0.0
    %v746 = vmin.f32 %v743, 1.0
    %v747 = vmin.f32 %v744, 1.0
    %v748 = vmin.f32 %v745, 1.0
    %749 = vmatprep.subr.mxu0 0.0
    %750 = vmatpush1.msra.mxu0 %v746
    %751 = vmatprep.subr.mxu0 0.0
    %752 = vmatpush1.msra.mxu0 %v747
    %753 = vmatprep.subr.mxu0 0.0
    %754 = vmatpush1.msra.mxu0 %v748
    %755 = vmatprep.subr.mxu0 0.0
    %756 = vmatpush1.msra.mxu0 0.0
    %757 = vmatprep.subr.mxu0 0.0
    %758 = vmatpush1.msra.mxu0 0.0
    %759 = vmatprep.subr.mxu0 0.0
    %760 = vmatpush1.msra.mxu0 0.0
    %761 = vmatprep.subr.mxu0 0.0
    %762 = vmatpush1.msra.mxu0 0.0
    %763 = vmatprep.subr.mxu0 0.0
    %764 = vmatpush1.msra.mxu0 0.0
    %765 = vmatprep.subr.mxu0 0.0
    %766 = vmatpush1.msra.mxu0 0.0
    %767 = vmatprep.subr.mxu0 0.0
    %768 = vmatpush1.msra.mxu0 0.0
    %769 = vmatprep.subr.mxu0 0.0
    %770 = vmatpush1.msra.mxu0 0.0
    %771 = vmatprep.subr.mxu0 0.0
    %772 = vmatpush1.msra.mxu0 0.0
    %773 = vmatprep.subr.mxu0 0.0
    %774 = vmatpush1.msra.mxu0 0.0
    %775 = vmatprep.subr.mxu0 0.0
    %776 = vmatpush1.msra.mxu0 0.0
    %777 = vmatprep.subr.mxu0 0.0
    %778 = vmatpush1.msra.mxu0 0.0
    %779 = vmatprep.subr.mxu0 0.0
    %780 = vmatpush1.msra.mxu0 0.0
    %781 = vmatprep.subr.mxu0 0.0
    %782 = vmatpush1.msra.mxu0 0.0
    %783 = vmatprep.subr.mxu0 0.0
    %784 = vmatpush1.msra.mxu0 0.0
    %785 = vmatprep.subr.mxu0 0.0
    %786 = vmatpush1.msra.mxu0 0.0
    %787 = vmatprep.subr.mxu0 0.0
    %788 = vmatpush1.msra.mxu0 0.0
    %789 = vmatprep.subr.mxu0 0.0
    %790 = vmatpush1.msra.mxu0 0.0
    %791 = vmatprep.subr.mxu0 0.0
    %792 = vmatpush1.msra.mxu0 0.0
    %793 = vmatprep.subr.mxu0 0.0
    %794 = vmatpush1.msra.mxu0 0.0
    %795 = vmatprep.subr.mxu0 0.0
    %796 = vmatpush1.msra.mxu0 0.0
    %797 = vmatprep.subr.mxu0 0.0
    %798 = vmatpush1.msra.mxu0 0.0
    %799 = vmatprep.subr.mxu0 0.0
    %800 = vmatpush1.msra.mxu0 0.0
    %801 = vmatprep.subr.mxu0 0.0
    %802 = vmatpush1.msra.mxu0 0.0
    %803 = vmatprep.subr.mxu0 0.0
    %804 = vmatpush1.msra.mxu0 0.0
    %805 = vmatprep.subr.mxu0 0.0
    %806 = vmatpush1.msra.mxu0 0.0
    %807 = vmatprep.subr.mxu0 0.0
    %808 = vmatpush1.msra.mxu0 0.0
    %809 = vmatprep.subr.mxu0 0.0
    %810 = vmatpush1.msra.mxu0 0.0
    %811 = vmatprep.subr.mxu0 0.0
    %812 = vmatpush1.msra.mxu0 0.0
    %813 = vmatprep.mubr.f32.mxu0 0.0
    %814 = vmatmul.mubr.f32.gmra.mrb[0].mxu0 %v311
    %v815 = vpop.f32.mrb[0].mxu0
    %v816 = vadd.f32 %v184, %v815
    %v817 = vpop.f32.mrb[0].mxu0
    %818 = vmatprep.mubr.f32.mxu0 0.0
    %819 = vmatmul.mubr.f32.gmra.mrb[0].mxu0 %v314
    %v820 = vpop.f32.mrb[0].mxu0
    %v821 = vadd.f32 %v185, %v820
    %v822 = vpop.f32.mrb[0].mxu0
    %823 = vmatprep.mubr.f32.mxu0 0.0
    %824 = vmatmul.mubr.f32.gmra.mrb[0].mxu0 %v317
    %v825 = vpop.f32.mrb[0].mxu0
    %v826 = vadd.f32 %v186, %v825
    %v827 = vpop.f32.mrb[0].mxu0
    %828 = vdwg.mxu0
    %v829 = vmax.f32 %v816, 0.0
    %v830 = vmax.f32 %v821, 0.0
    %v831 = vmax.f32 %v826, 0.0
    %v832 = vmin.f32 %v829, 1.0
    %v833 = vmin.f32 %v830, 1.0
    %v834 = vmin.f32 %v831, 1.0
    %835 = vmatprep.subr.mxu0 0.0
    %836 = vmatpush1.msra.mxu0 %v832
    %837 = vmatprep.subr.mxu0 0.0
    %838 = vmatpush1.msra.mxu0 %v833
    %839 = vmatprep.subr.mxu0 0.0
    %840 = vmatpush1.msra.mxu0 %v834
    %841 = vmatprep.subr.mxu0 0.0
    %842 = vmatpush1.msra.mxu0 0.0
    %843 = vmatprep.subr.mxu0 0.0
    %844 = vmatpush1.msra.mxu0 0.0
    %845 = vmatprep.subr.mxu0 0.0
    %846 = vmatpush1.msra.mxu0 0.0
    %847 = vmatprep.subr.mxu0 0.0
    %848 = vmatpush1.msra.mxu0 0.0
    %849 = vmatprep.subr.mxu0 0.0
    %850 = vmatpush1.msra.mxu0 0.0
    %851 = vmatprep.subr.mxu0 0.0
    %852 = vmatpush1.msra.mxu0 0.0
    %853 = vmatprep.subr.mxu0 0.0
    %854 = vmatpush1.msra.mxu0 0.0
    %855 = vmatprep.subr.mxu0 0.0
    %856 = vmatpush1.msra.mxu0 0.0
    %857 = vmatprep.subr.mxu0 0.0
    %858 = vmatpush1.msra.mxu0 0.0
    %859 = vmatprep.subr.mxu0 0.0
    %860 = vmatpush1.msra.mxu0 0.0
    %861 = vmatprep.subr.mxu0 0.0
    %862 = vmatpush1.msra.mxu0 0.0
    %863 = vmatprep.subr.mxu0 0.0
    %864 = vmatpush1.msra.mxu0 0.0
    %865 = vmatprep.subr.mxu0 0.0
    %866 = vmatpush1.msra.mxu0 0.0
    %867 = vmatprep.subr.mxu0 0.0
    %868 = vmatpush1.msra.mxu0 0.0
    %869 = vmatprep.subr.mxu0 0.0
    %870 = vmatpush1.msra.mxu0 0.0
    %871 = vmatprep.subr.mxu0 0.0
    %872 = vmatpush1.msra.mxu0 0.0
    %873 = vmatprep.subr.mxu0 0.0
    %874 = vmatpush1.msra.mxu0 0.0
    %875 = vmatprep.subr.mxu0 0.0
    %876 = vmatpush1.msra.mxu0 0.0
    %877 = vmatprep.subr.mxu0 0.0
    %878 = vmatpush1.msra.mxu0 0.0
    %879 = vmatprep.subr.mxu0 0.0
    %880 = vmatpush1.msra.mxu0 0.0
    %881 = vmatprep.subr.mxu0 0.0
    %882 = vmatpush1.msra.mxu0 0.0
    %883 = vmatprep.subr.mxu0 0.0
    %884 = vmatpush1.msra.mxu0 0.0
    %885 = vmatprep.subr.mxu0 0.0
    %886 = vmatpush1.msra.mxu0 0.0
    %887 = vmatprep.subr.mxu0 0.0
    %888 = vmatpush1.msra.mxu0 0.0
    %889 = vmatprep.subr.mxu0 0.0
    %890 = vmatpush1.msra.mxu0 0.0
    %891 = vmatprep.subr.mxu0 0.0
    %892 = vmatpush1.msra.mxu0 0.0
    %893 = vmatprep.subr.mxu0 0.0
    %894 = vmatpush1.msra.mxu0 0.0
    %895 = vmatprep.subr.mxu0 0.0
    %896 = vmatpush1.msra.mxu0 0.0
    %897 = vmatprep.subr.mxu0 0.0
    %898 = vmatpush1.msra.mxu0 0.0
    %899 = vmatprep.mubr.f32.mxu0 0.0
    %900 = vmatmul.mubr.f32.gmra.mrb[0].mxu0 %v311
    %v901 = vpop.f32.mrb[0].mxu0
    %v902 = vadd.f32 %v184, %v901
    %v903 = vpop.f32.mrb[0].mxu0
    %904 = vmatprep.mubr.f32.mxu0 0.0
    %905 = vmatmul.mubr.f32.gmra.mrb[0].mxu0 %v314
    %v906 = vpop.f32.mrb[0].mxu0
    %v907 = vadd.f32 %v185, %v906
    %v908 = vpop.f32.mrb[0].mxu0
    %909 = vmatprep.mubr.f32.mxu0 0.0
    %910 = vmatmul.mubr.f32.gmra.mrb[0].mxu0 %v317
    %v911 = vpop.f32.mrb[0].mxu0
    %v912 = vadd.f32 %v186, %v911
    %v913 = vpop.f32.mrb[0].mxu0
    %914 = vdwg.mxu0
    %v915 = vmax.f32 %v902, 0.0
    %v916 = vmax.f32 %v907, 0.0
    %v917 = vmax.f32 %v912, 0.0
    %v918 = vmin.f32 %v915, 1.0
    %v919 = vmin.f32 %v916, 1.0
    %v920 = vmin.f32 %v917, 1.0
    %921 = vmatprep.subr.mxu0 0.0
    %922 = vmatpush1.msra.mxu0 %v918
    %923 = vmatprep.subr.mxu0 0.0
    %924 = vmatpush1.msra.mxu0 %v919
    %925 = vmatprep.subr.mxu0 0.0
    %926 = vmatpush1.msra.mxu0 %v920
    %927 = vmatprep.subr.mxu0 0.0
    %928 = vmatpush1.msra.mxu0 0.0
    %929 = vmatprep.subr.mxu0 0.0
    %930 = vmatpush1.msra.mxu0 0.0
    %931 = vmatprep.subr.mxu0 0.0
    %932 = vmatpush1.msra.mxu0 0.0
    %933 = vmatprep.subr.mxu0 0.0
    %934 = vmatpush1.msra.mxu0 0.0
    %935 = vmatprep.subr.mxu0 0.0
    %936 = vmatpush1.msra.mxu0 0.0
    %937 = vmatprep.subr.mxu0 0.0
    %938 = vmatpush1.msra.mxu0 0.0
    %939 = vmatprep.subr.mxu0 0.0
    %940 = vmatpush1.msra.mxu0 0.0
    %941 = vmatprep.subr.mxu0 0.0
    %942 = vmatpush1.msra.mxu0 0.0
    %943 = vmatprep.subr.mxu0 0.0
    %944 = vmatpush1.msra.mxu0 0.0
    %945 = vmatprep.subr.mxu0 0.0
    %946 = vmatpush1.msra.mxu0 0.0
    %947 = vmatprep.subr.mxu0 0.0
    %948 = vmatpush1.msra.mxu0 0.0
    %949 = vmatprep.subr.mxu0 0.0
    %950 = vmatpush1.msra.mxu0 0.0
    %951 = vmatprep.subr.mxu0 0.0
    %952 = vmatpush1.msra.mxu0 0.0
    %953 = vmatprep.subr.mxu0 0.0
    %954 = vmatpush1.msra.mxu0 0.0
    %955 = vmatprep.subr.mxu0 0.0
    %956 = vmatpush1.msra.mxu0 0.0
    %957 = vmatprep.subr.mxu0 0.0
    %958 = vmatpush1.msra.mxu0 0.0
    %959 = vmatprep.subr.mxu0 0.0
    %960 = vmatpush1.msra.mxu0 0.0
    %961 = vmatprep.subr.mxu0 0.0
    %962 = vmatpush1.msra.mxu0 0.0
    %963 = vmatprep.subr.mxu0 0.0
    %964 = vmatpush1.msra.mxu0 0.0
    %965 = vmatprep.subr.mxu0 0.0
    %966 = vmatpush1.msra.mxu0 0.0
    %967 = vmatprep.subr.mxu0 0.0
    %968 = vmatpush1.msra.mxu0 0.0
    %969 = vmatprep.subr.mxu0 0.0
    %970 = vmatpush1.msra.mxu0 0.0
    %971 = vmatprep.subr.mxu0 0.0
    %972 = vmatpush1.msra.mxu0 0.0
    %973 = vmatprep.subr.mxu0 0.0
    %974 = vmatpush1.msra.mxu0 0.0
    %975 = vmatprep.subr.mxu0 0.0
    %976 = vmatpush1.msra.mxu0 0.0
    %977 = vmatprep.subr.mxu0 0.0
    %978 = vmatpush1.msra.mxu0 0.0
    %979 = vmatprep.subr.mxu0 0.0
    %980 = vmatpush1.msra.mxu0 0.0
    %981 = vmatprep.subr.mxu0 0.0
    %982 = vmatpush1.msra.mxu0 0.0
    %983 = vmatprep.subr.mxu0 0.0
    %984 = vmatpush1.msra.mxu0 0.0
    %985 = vmatprep.mubr.f32.mxu0 0.0
    %986 = vmatmul.mubr.f32.gmra.mrb[0].mxu0 %v311
    %v987 = vpop.f32.mrb[0].mxu0
    %v988 = vadd.f32 %v184, %v987
    %v989 = vpop.f32.mrb[0].mxu0
    %990 = vmatprep.mubr.f32.mxu0 0.0
    %991 = vmatmul.mubr.f32.gmra.mrb[0].mxu0 %v314
    %v992 = vpop.f32.mrb[0].mxu0
    %v993 = vadd.f32 %v185, %v992
    %v994 = vpop.f32.mrb[0].mxu0
    %995 = vmatprep.mubr.f32.mxu0 0.0
    %996 = vmatmul.mubr.f32.gmra.mrb[0].mxu0 %v317
    %v997 = vpop.f32.mrb[0].mxu0
    %v998 = vadd.f32 %v186, %v997
    %v999 = vpop.f32.mrb[0].mxu0
    %1000 = vdwg.mxu0
    %v1001 = vmax.f32 %v988, 0.0
    %v1002 = vmax.f32 %v993, 0.0
    %v1003 = vmax.f32 %v998, 0.0
    %v1004 = vmin.f32 %v1001, 1.0
    %v1005 = vmin.f32 %v1002, 1.0
    %v1006 = vmin.f32 %v1003, 1.0
    %1007 = vmatprep.subr.mxu0 0.0
    %1008 = vmatpush1.msra.mxu0 %v1004
    %1009 = vmatprep.subr.mxu0 0.0
    %1010 = vmatpush1.msra.mxu0 %v1005
    %1011 = vmatprep.subr.mxu0 0.0
    %1012 = vmatpush1.msra.mxu0 %v1006
    %1013 = vmatprep.subr.mxu0 0.0
    %1014 = vmatpush1.msra.mxu0 0.0
    %1015 = vmatprep.subr.mxu0 0.0
    %1016 = vmatpush1.msra.mxu0 0.0
    %1017 = vmatprep.subr.mxu0 0.0
    %1018 = vmatpush1.msra.mxu0 0.0
    %1019 = vmatprep.subr.mxu0 0.0
    %1020 = vmatpush1.msra.mxu0 0.0
    %1021 = vmatprep.subr.mxu0 0.0
    %1022 = vmatpush1.msra.mxu0 0.0
    %1023 = vmatprep.subr.mxu0 0.0
    %1024 = vmatpush1.msra.mxu0 0.0
    %1025 = vmatprep.subr.mxu0 0.0
    %1026 = vmatpush1.msra.mxu0 0.0
    %1027 = vmatprep.subr.mxu0 0.0
    %1028 = vmatpush1.msra.mxu0 0.0
    %1029 = vmatprep.subr.mxu0 0.0
    %1030 = vmatpush1.msra.mxu0 0.0
    %1031 = vmatprep.subr.mxu0 0.0
    %1032 = vmatpush1.msra.mxu0 0.0
    %1033 = vmatprep.subr.mxu0 0.0
    %1034 = vmatpush1.msra.mxu0 0.0
    %1035 = vmatprep.subr.mxu0 0.0
    %1036 = vmatpush1.msra.mxu0 0.0
    %1037 = vmatprep.subr.mxu0 0.0
    %1038 = vmatpush1.msra.mxu0 0.0
    %1039 = vmatprep.subr.mxu0 0.0
    %1040 = vmatpush1.msra.mxu0 0.0
    %1041 = vmatprep.subr.mxu0 0.0
    %1042 = vmatpush1.msra.mxu0 0.0
    %1043 = vmatprep.subr.mxu0 0.0
    %1044 = vmatpush1.msra.mxu0 0.0
    %1045 = vmatprep.subr.mxu0 0.0
    %1046 = vmatpush1.msra.mxu0 0.0
    %1047 = vmatprep.subr.mxu0 0.0
    %1048 = vmatpush1.msra.mxu0 0.0
    %1049 = vmatprep.subr.mxu0 0.0
    %1050 = vmatpush1.msra.mxu0 0.0
    %1051 = vmatprep.subr.mxu0 0.0
    %1052 = vmatpush1.msra.mxu0 0.0
    %1053 = vmatprep.subr.mxu0 0.0
    %1054 = vmatpush1.msra.mxu0 0.0
    %1055 = vmatprep.subr.mxu0 0.0
    %1056 = vmatpush1.msra.mxu0 0.0
    %1057 = vmatprep.subr.mxu0 0.0
    %1058 = vmatpush1.msra.mxu0 0.0
    %1059 = vmatprep.subr.mxu0 0.0
    %1060 = vmatpush1.msra.mxu0 0.0
    %1061 = vmatprep.subr.mxu0 0.0
    %1062 = vmatpush1.msra.mxu0 0.0
    %1063 = vmatprep.subr.mxu0 0.0
    %1064 = vmatpush1.msra.mxu0 0.0
    %1065 = vmatprep.subr.mxu0 0.0
    %1066 = vmatpush1.msra.mxu0 0.0
    %1067 = vmatprep.subr.mxu0 0.0
    %1068 = vmatpush1.msra.mxu0 0.0
    %1069 = vmatprep.subr.mxu0 0.0
    %1070 = vmatpush1.msra.mxu0 0.0
    %1071 = vmatprep.mubr.f32.mxu0 0.0
    %1072 = vmatmul.mubr.f32.gmra.mrb[0].mxu0 %v311
    %v1073 = vpop.f32.mrb[0].mxu0
    %v1074 = vadd.f32 %v184, %v1073
    %v1075 = vpop.f32.mrb[0].mxu0
    %1076 = vmatprep.mubr.f32.mxu0 0.0
    %1077 = vmatmul.mubr.f32.gmra.mrb[0].mxu0 %v314
    %v1078 = vpop.f32.mrb[0].mxu0
    %v1079 = vadd.f32 %v185, %v1078
    %v1080 = vpop.f32.mrb[0].mxu0
    %1081 = vmatprep.mubr.f32.mxu0 0.0
    %1082 = vmatmul.mubr.f32.gmra.mrb[0].mxu0 %v317
    %v1083 = vpop.f32.mrb[0].mxu0
    %v1084 = vadd.f32 %v186, %v1083
    %v1085 = vpop.f32.mrb[0].mxu0
    %1086 = vdwg.mxu0
    %v1087 = vmax.f32 %v1074, 0.0
    %v1088 = vmax.f32 %v1079, 0.0
    %v1089 = vmax.f32 %v1084, 0.0
    %v1090 = vmin.f32 %v1087, 1.0
    %v1091 = vmin.f32 %v1088, 1.0
    %v1092 = vmin.f32 %v1089, 1.0
    %1093 = vmatprep.subr.mxu0 0.0
    %1094 = vmatpush1.msra.mxu0 %v1090
    %1095 = vmatprep.subr.mxu0 0.0
    %1096 = vmatpush1.msra.mxu0 %v1091
    %1097 = vmatprep.subr.mxu0 0.0
    %1098 = vmatpush1.msra.mxu0 %v1092
    %1099 = vmatprep.subr.mxu0 0.0
    %1100 = vmatpush1.msra.mxu0 0.0
    %1101 = vmatprep.subr.mxu0 0.0
    %1102 = vmatpush1.msra.mxu0 0.0
    %1103 = vmatprep.subr.mxu0 0.0
    %1104 = vmatpush1.msra.mxu0 0.0
    %1105 = vmatprep.subr.mxu0 0.0
    %1106 = vmatpush1.msra.mxu0 0.0
    %1107 = vmatprep.subr.mxu0 0.0
    %1108 = vmatpush1.msra.mxu0 0.0
    %1109 = vmatprep.subr.mxu0 0.0
    %1110 = vmatpush1.msra.mxu0 0.0
    %1111 = vmatprep.subr.mxu0 0.0
    %1112 = vmatpush1.msra.mxu0 0.0
    %1113 = vmatprep.subr.mxu0 0.0
    %1114 = vmatpush1.msra.mxu0 0.0
    %1115 = vmatprep.subr.mxu0 0.0
    %1116 = vmatpush1.msra.mxu0 0.0
    %1117 = vmatprep.subr.mxu0 0.0
    %1118 = vmatpush1.msra.mxu0 0.0
    %1119 = vmatprep.subr.mxu0 0.0
    %1120 = vmatpush1.msra.mxu0 0.0
    %1121 = vmatprep.subr.mxu0 0.0
    %1122 = vmatpush1.msra.mxu0 0.0
    %1123 = vmatprep.subr.mxu0 0.0
    %1124 = vmatpush1.msra.mxu0 0.0
    %1125 = vmatprep.subr.mxu0 0.0
    %1126 = vmatpush1.msra.mxu0 0.0
    %1127 = vmatprep.subr.mxu0 0.0
    %1128 = vmatpush1.msra.mxu0 0.0
    %1129 = vmatprep.subr.mxu0 0.0
    %1130 = vmatpush1.msra.mxu0 0.0
    %1131 = vmatprep.subr.mxu0 0.0
    %1132 = vmatpush1.msra.mxu0 0.0
    %1133 = vmatprep.subr.mxu0 0.0
    %1134 = vmatpush1.msra.mxu0 0.0
    %1135 = vmatprep.subr.mxu0 0.0
    %1136 = vmatpush1.msra.mxu0 0.0
    %1137 = vmatprep.subr.mxu0 0.0
    %1138 = vmatpush1.msra.mxu0 0.0
    %1139 = vmatprep.subr.mxu0 0.0
    %1140 = vmatpush1.msra.mxu0 0.0
    %1141 = vmatprep.subr.mxu0 0.0
    %1142 = vmatpush1.msra.mxu0 0.0
    %1143 = vmatprep.subr.mxu0 0.0
    %1144 = vmatpush1.msra.mxu0 0.0
    %1145 = vmatprep.subr.mxu0 0.0
    %1146 = vmatpush1.msra.mxu0 0.0
    %1147 = vmatprep.subr.mxu0 0.0
    %1148 = vmatpush1.msra.mxu0 0.0
    %1149 = vmatprep.subr.mxu0 0.0
    %1150 = vmatpush1.msra.mxu0 0.0
    %1151 = vmatprep.subr.mxu0 0.0
    %1152 = vmatpush1.msra.mxu0 0.0
    %1153 = vmatprep.subr.mxu0 0.0
    %1154 = vmatpush1.msra.mxu0 0.0
    %1155 = vmatprep.subr.mxu0 0.0
    %1156 = vmatpush1.msra.mxu0 0.0
    %1157 = vmatprep.mubr.f32.mxu0 0.0
    %1158 = vmatmul.mubr.f32.gmra.mrb[0].mxu0 %v311
    %v1159 = vpop.f32.mrb[0].mxu0
    %v1160 = vadd.f32 %v184, %v1159
    %v1161 = vpop.f32.mrb[0].mxu0
    %1162 = vmatprep.mubr.f32.mxu0 0.0
    %1163 = vmatmul.mubr.f32.gmra.mrb[0].mxu0 %v314
    %v1164 = vpop.f32.mrb[0].mxu0
    %v1165 = vadd.f32 %v185, %v1164
    %v1166 = vpop.f32.mrb[0].mxu0
    %1167 = vmatprep.mubr.f32.mxu0 0.0
    %1168 = vmatmul.mubr.f32.gmra.mrb[0].mxu0 %v317
    %v1169 = vpop.f32.mrb[0].mxu0
    %v1170 = vadd.f32 %v186, %v1169
    %v1171 = vpop.f32.mrb[0].mxu0
    %1172 = vdwg.mxu0
    %v1173 = vmax.f32 %v1160, 0.0
    %v1174 = vmax.f32 %v1165, 0.0
    %v1175 = vmax.f32 %v1170, 0.0
    %v1176 = vmin.f32 %v1173, 1.0
    %v1177 = vmin.f32 %v1174, 1.0
    %v1178 = vmin.f32 %v1175, 1.0
    %1179 = vmatprep.subr.mxu0 0.0
    %1180 = vmatpush1.msra.mxu0 %v1176
    %1181 = vmatprep.subr.mxu0 0.0
    %1182 = vmatpush1.msra.mxu0 %v1177
    %1183 = vmatprep.subr.mxu0 0.0
    %1184 = vmatpush1.msra.mxu0 %v1178
    %1185 = vmatprep.subr.mxu0 0.0
    %1186 = vmatpush1.msra.mxu0 0.0
    %1187 = vmatprep.subr.mxu0 0.0
    %1188 = vmatpush1.msra.mxu0 0.0
    %1189 = vmatprep.subr.mxu0 0.0
    %1190 = vmatpush1.msra.mxu0 0.0
    %1191 = vmatprep.subr.mxu0 0.0
    %1192 = vmatpush1.msra.mxu0 0.0
    %1193 = vmatprep.subr.mxu0 0.0
    %1194 = vmatpush1.msra.mxu0 0.0
    %1195 = vmatprep.subr.mxu0 0.0
    %1196 = vmatpush1.msra.mxu0 0.0
    %1197 = vmatprep.subr.mxu0 0.0
    %1198 = vmatpush1.msra.mxu0 0.0
    %1199 = vmatprep.subr.mxu0 0.0
    %1200 = vmatpush1.msra.mxu0 0.0
    %1201 = vmatprep.subr.mxu0 0.0
    %1202 = vmatpush1.msra.mxu0 0.0
    %1203 = vmatprep.subr.mxu0 0.0
    %1204 = vmatpush1.msra.mxu0 0.0
    %1205 = vmatprep.subr.mxu0 0.0
    %1206 = vmatpush1.msra.mxu0 0.0
    %1207 = vmatprep.subr.mxu0 0.0
    %1208 = vmatpush1.msra.mxu0 0.0
    %1209 = vmatprep.subr.mxu0 0.0
    %1210 = vmatpush1.msra.mxu0 0.0
    %1211 = vmatprep.subr.mxu0 0.0
    %1212 = vmatpush1.msra.mxu0 0.0
    %1213 = vmatprep.subr.mxu0 0.0
    %1214 = vmatpush1.msra.mxu0 0.0
    %1215 = vmatprep.subr.mxu0 0.0
    %1216 = vmatpush1.msra.mxu0 0.0
    %1217 = vmatprep.subr.mxu0 0.0
    %1218 = vmatpush1.msra.mxu0 0.0
    %1219 = vmatprep.subr.mxu0 0.0
    %1220 = vmatpush1.msra.mxu0 0.0
    %1221 = vmatprep.subr.mxu0 0.0
    %1222 = vmatpush1.msra.mxu0 0.0
    %1223 = vmatprep.subr.mxu0 0.0
    %1224 = vmatpush1.msra.mxu0 0.0
    %1225 = vmatprep.subr.mxu0 0.0
    %1226 = vmatpush1.msra.mxu0 0.0
    %1227 = vmatprep.subr.mxu0 0.0
    %1228 = vmatpush1.msra.mxu0 0.0
    %1229 = vmatprep.subr.mxu0 0.0
    %1230 = vmatpush1.msra.mxu0 0.0
    %1231 = vmatprep.subr.mxu0 0.0
    %1232 = vmatpush1.msra.mxu0 0.0
    %1233 = vmatprep.subr.mxu0 0.0
    %1234 = vmatpush1.msra.mxu0 0.0
    %1235 = vmatprep.subr.mxu0 0.0
    %1236 = vmatpush1.msra.mxu0 0.0
    %1237 = vmatprep.subr.mxu0 0.0
    %1238 = vmatpush1.msra.mxu0 0.0
    %1239 = vmatprep.subr.mxu0 0.0
    %1240 = vmatpush1.msra.mxu0 0.0
    %1241 = vmatprep.subr.mxu0 0.0
    %1242 = vmatpush1.msra.mxu0 0.0
    %1243 = vmatprep.mubr.f32.mxu0 0.0
    %1244 = vmatmul.mubr.f32.gmra.mrb[0].mxu0 %v311
    %v1245 = vpop.f32.mrb[0].mxu0
    %v1246 = vadd.f32 %v184, %v1245
    %v1247 = vpop.f32.mrb[0].mxu0
    %1248 = vmatprep.mubr.f32.mxu0 0.0
    %1249 = vmatmul.mubr.f32.gmra.mrb[0].mxu0 %v314
    %v1250 = vpop.f32.mrb[0].mxu0
    %v1251 = vadd.f32 %v185, %v1250
    %v1252 = vpop.f32.mrb[0].mxu0
    %1253 = vmatprep.mubr.f32.mxu0 0.0
    %1254 = vmatmul.mubr.f32.gmra.mrb[0].mxu0 %v317
    %v1255 = vpop.f32.mrb[0].mxu0
    %v1256 = vadd.f32 %v186, %v1255
    %v1257 = vpop.f32.mrb[0].mxu0
    %1258 = vdwg.mxu0
    %v1259 = vmax.f32 %v1246, 0.0
    %v1260 = vmax.f32 %v1251, 0.0
    %v1261 = vmax.f32 %v1256, 0.0
    %v1262 = vmin.f32 %v1259, 1.0
    %v1263 = vmin.f32 %v1260, 1.0
    %v1264 = vmin.f32 %v1261, 1.0
    %1265 = vmatprep.subr.mxu0 0.0
    %1266 = vmatpush1.msra.mxu0 %v1262
    %1267 = vmatprep.subr.mxu0 0.0
    %1268 = vmatpush1.msra.mxu0 %v1263
    %1269 = vmatprep.subr.mxu0 0.0
    %1270 = vmatpush1.msra.mxu0 %v1264
    %1271 = vmatprep.subr.mxu0 0.0
    %1272 = vmatpush1.msra.mxu0 0.0
    %1273 = vmatprep.subr.mxu0 0.0
    %1274 = vmatpush1.msra.mxu0 0.0
    %1275 = vmatprep.subr.mxu0 0.0
    %1276 = vmatpush1.msra.mxu0 0.0
    %1277 = vmatprep.subr.mxu0 0.0
    %1278 = vmatpush1.msra.mxu0 0.0
    %1279 = vmatprep.subr.mxu0 0.0
    %1280 = vmatpush1.msra.mxu0 0.0
    %1281 = vmatprep.subr.mxu0 0.0
    %1282 = vmatpush1.msra.mxu0 0.0
    %1283 = vmatprep.subr.mxu0 0.0
    %1284 = vmatpush1.msra.mxu0 0.0
    %1285 = vmatprep.subr.mxu0 0.0
    %1286 = vmatpush1.msra.mxu0 0.0
    %1287 = vmatprep.subr.mxu0 0.0
    %1288 = vmatpush1.msra.mxu0 0.0
    %1289 = vmatprep.subr.mxu0 0.0
    %1290 = vmatpush1.msra.mxu0 0.0
    %1291 = vmatprep.subr.mxu0 0.0
    %1292 = vmatpush1.msra.mxu0 0.0
    %1293 = vmatprep.subr.mxu0 0.0
    %1294 = vmatpush1.msra.mxu0 0.0
    %1295 = vmatprep.subr.mxu0 0.0
    %1296 = vmatpush1.msra.mxu0 0.0
    %1297 = vmatprep.subr.mxu0 0.0
    %1298 = vmatpush1.msra.mxu0 0.0
    %1299 = vmatprep.subr.mxu0 0.0
    %1300 = vmatpush1.msra.mxu0 0.0
    %1301 = vmatprep.subr.mxu0 0.0
    %1302 = vmatpush1.msra.mxu0 0.0
    %1303 = vmatprep.subr.mxu0 0.0
    %1304 = vmatpush1.msra.mxu0 0.0
    %1305 = vmatprep.subr.mxu0 0.0
    %1306 = vmatpush1.msra.mxu0 0.0
    %1307 = vmatprep.subr.mxu0 0.0
    %1308 = vmatpush1.msra.mxu0 0.0
    %1309 = vmatprep.subr.mxu0 0.0
    %1310 = vmatpush1.msra.mxu0 0.0
    %1311 = vmatprep.subr.mxu0 0.0
    %1312 = vmatpush1.msra.mxu0 0.0
    %1313 = vmatprep.subr.mxu0 0.0
    %1314 = vmatpush1.msra.mxu0 0.0
    %1315 = vmatprep.subr.mxu0 0.0
    %1316 = vmatpush1.msra.mxu0 0.0
    %1317 = vmatprep.subr.mxu0 0.0
    %1318 = vmatpush1.msra.mxu0 0.0
    %1319 = vmatprep.subr.mxu0 0.0
    %1320 = vmatpush1.msra.mxu0 0.0
    %1321 = vmatprep.subr.mxu0 0.0
    %1322 = vmatpush1.msra.mxu0 0.0
    %1323 = vmatprep.subr.mxu0 0.0
    %1324 = vmatpush1.msra.mxu0 0.0
    %1325 = vmatprep.subr.mxu0 0.0
    %1326 = vmatpush1.msra.mxu0 0.0
    %1327 = vmatprep.subr.mxu0 0.0
    %1328 = vmatpush1.msra.mxu0 0.0
    %1329 = vmatprep.mubr.f32.mxu0 0.0
    %1330 = vmatmul.mubr.f32.gmra.mrb[0].mxu0 %v311
    %v1331 = vpop.f32.mrb[0].mxu0
    %v1332 = vadd.f32 %v184, %v1331
    %v1333 = vpop.f32.mrb[0].mxu0
    %1334 = vmatprep.mubr.f32.mxu0 0.0
    %1335 = vmatmul.mubr.f32.gmra.mrb[0].mxu0 %v314
    %v1336 = vpop.f32.mrb[0].mxu0
    %v1337 = vadd.f32 %v185, %v1336
    %v1338 = vpop.f32.mrb[0].mxu0
    %1339 = vmatprep.mubr.f32.mxu0 0.0
    %1340 = vmatmul.mubr.f32.gmra.mrb[0].mxu0 %v317
    %v1341 = vpop.f32.mrb[0].mxu0
    %v1342 = vadd.f32 %v186, %v1341
    %v1343 = vpop.f32.mrb[0].mxu0
    %1344 = vdwg.mxu0
    %v1345 = vmax.f32 %v1332, 0.0
    %v1346 = vmax.f32 %v1337, 0.0
    %v1347 = vmax.f32 %v1342, 0.0
    %v1348 = vmin.f32 %v1345, 1.0
    %v1349 = vmin.f32 %v1346, 1.0
    %v1350 = vmin.f32 %v1347, 1.0
    %1351 = vmatprep.subr.mxu0 0.0
    %1352 = vmatpush1.msra.mxu0 %v1348
    %1353 = vmatprep.subr.mxu0 0.0
    %1354 = vmatpush1.msra.mxu0 %v1349
    %1355 = vmatprep.subr.mxu0 0.0
    %1356 = vmatpush1.msra.mxu0 %v1350
    %1357 = vmatprep.subr.mxu0 0.0
    %1358 = vmatpush1.msra.mxu0 0.0
    %1359 = vmatprep.subr.mxu0 0.0
    %1360 = vmatpush1.msra.mxu0 0.0
    %1361 = vmatprep.subr.mxu0 0.0
    %1362 = vmatpush1.msra.mxu0 0.0
    %1363 = vmatprep.subr.mxu0 0.0
    %1364 = vmatpush1.msra.mxu0 0.0
    %1365 = vmatprep.subr.mxu0 0.0
    %1366 = vmatpush1.msra.mxu0 0.0
    %1367 = vmatprep.subr.mxu0 0.0
    %1368 = vmatpush1.msra.mxu0 0.0
    %1369 = vmatprep.subr.mxu0 0.0
    %1370 = vmatpush1.msra.mxu0 0.0
    %1371 = vmatprep.subr.mxu0 0.0
    %1372 = vmatpush1.msra.mxu0 0.0
    %1373 = vmatprep.subr.mxu0 0.0
    %1374 = vmatpush1.msra.mxu0 0.0
    %1375 = vmatprep.subr.mxu0 0.0
    %1376 = vmatpush1.msra.mxu0 0.0
    %1377 = vmatprep.subr.mxu0 0.0
    %1378 = vmatpush1.msra.mxu0 0.0
    %1379 = vmatprep.subr.mxu0 0.0
    %1380 = vmatpush1.msra.mxu0 0.0
    %1381 = vmatprep.subr.mxu0 0.0
    %1382 = vmatpush1.msra.mxu0 0.0
    %1383 = vmatprep.subr.mxu0 0.0
    %1384 = vmatpush1.msra.mxu0 0.0
    %1385 = vmatprep.subr.mxu0 0.0
    %1386 = vmatpush1.msra.mxu0 0.0
    %1387 = vmatprep.subr.mxu0 0.0
    %1388 = vmatpush1.msra.mxu0 0.0
    %1389 = vmatprep.subr.mxu0 0.0
    %1390 = vmatpush1.msra.mxu0 0.0
    %1391 = vmatprep.subr.mxu0 0.0
    %1392 = vmatpush1.msra.mxu0 0.0
    %1393 = vmatprep.subr.mxu0 0.0
    %1394 = vmatpush1.msra.mxu0 0.0
    %1395 = vmatprep.subr.mxu0 0.0
    %1396 = vmatpush1.msra.mxu0 0.0
    %1397 = vmatprep.subr.mxu0 0.0
    %1398 = vmatpush1.msra.mxu0 0.0
    %1399 = vmatprep.subr.mxu0 0.0
    %1400 = vmatpush1.msra.mxu0 0.0
    %1401 = vmatprep.subr.mxu0 0.0
    %1402 = vmatpush1.msra.mxu0 0.0
    %1403 = vmatprep.subr.mxu0 0.0
    %1404 = vmatpush1.msra.mxu0 0.0
    %1405 = vmatprep.subr.mxu0 0.0
    %1406 = vmatpush1.msra.mxu0 0.0
    %1407 = vmatprep.subr.mxu0 0.0
    %1408 = vmatpush1.msra.mxu0 0.0
    %1409 = vmatprep.subr.mxu0 0.0
    %1410 = vmatpush1.msra.mxu0 0.0
    %1411 = vmatprep.subr.mxu0 0.0
    %1412 = vmatpush1.msra.mxu0 0.0
    %1413 = vmatprep.subr.mxu0 0.0
    %1414 = vmatpush1.msra.mxu0 0.0
    %1415 = vmatprep.mubr.f32.mxu0 0.0
    %1416 = vmatmul.mubr.f32.gmra.mrb[0].mxu0 %v311
    %v1417 = vpop.f32.mrb[0].mxu0
    %v1418 = vadd.f32 %v184, %v1417
    %v1419 = vpop.f32.mrb[0].mxu0
    %1420 = vmatprep.mubr.f32.mxu0 0.0
    %1421 = vmatmul.mubr.f32.gmra.mrb[0].mxu0 %v314
    %v1422 = vpop.f32.mrb[0].mxu0
    %v1423 = vadd.f32 %v185, %v1422
    %v1424 = vpop.f32.mrb[0].mxu0
    %1425 = vmatprep.mubr.f32.mxu0 0.0
    %1426 = vmatmul.mubr.f32.gmra.mrb[0].mxu0 %v317
    %v1427 = vpop.f32.mrb[0].mxu0
    %v1428 = vadd.f32 %v186, %v1427
    %v1429 = vpop.f32.mrb[0].mxu0
    %1430 = vdwg.mxu0
    %v1431 = vmax.f32 %v1418, 0.0
    %v1432 = vmax.f32 %v1423, 0.0
    %v1433 = vmax.f32 %v1428, 0.0
    %v1434 = vmin.f32 %v1431, 1.0
    %v1435 = vmin.f32 %v1432, 1.0
    %v1436 = vmin.f32 %v1433, 1.0
    %1437 = vmatprep.subr.mxu0 0.0
    %1438 = vmatpush1.msra.mxu0 %v1434
    %1439 = vmatprep.subr.mxu0 0.0
    %1440 = vmatpush1.msra.mxu0 %v1435
    %1441 = vmatprep.subr.mxu0 0.0
    %1442 = vmatpush1.msra.mxu0 %v1436
    %1443 = vmatprep.subr.mxu0 0.0
    %1444 = vmatpush1.msra.mxu0 0.0
    %1445 = vmatprep.subr.mxu0 0.0
    %1446 = vmatpush1.msra.mxu0 0.0
    %1447 = vmatprep.subr.mxu0 0.0
    %1448 = vmatpush1.msra.mxu0 0.0
    %1449 = vmatprep.subr.mxu0 0.0
    %1450 = vmatpush1.msra.mxu0 0.0
    %1451 = vmatprep.subr.mxu0 0.0
    %1452 = vmatpush1.msra.mxu0 0.0
    %1453 = vmatprep.subr.mxu0 0.0
    %1454 = vmatpush1.msra.mxu0 0.0
    %1455 = vmatprep.subr.mxu0 0.0
    %1456 = vmatpush1.msra.mxu0 0.0
    %1457 = vmatprep.subr.mxu0 0.0
    %1458 = vmatpush1.msra.mxu0 0.0
    %1459 = vmatprep.subr.mxu0 0.0
    %1460 = vmatpush1.msra.mxu0 0.0
    %1461 = vmatprep.subr.mxu0 0.0
    %1462 = vmatpush1.msra.mxu0 0.0
    %1463 = vmatprep.subr.mxu0 0.0
    %1464 = vmatpush1.msra.mxu0 0.0
    %1465 = vmatprep.subr.mxu0 0.0
    %1466 = vmatpush1.msra.mxu0 0.0
    %1467 = vmatprep.subr.mxu0 0.0
    %1468 = vmatpush1.msra.mxu0 0.0
    %1469 = vmatprep.subr.mxu0 0.0
    %1470 = vmatpush1.msra.mxu0 0.0
    %1471 = vmatprep.subr.mxu0 0.0
    %1472 = vmatpush1.msra.mxu0 0.0
    %1473 = vmatprep.subr.mxu0 0.0
    %1474 = vmatpush1.msra.mxu0 0.0
    %1475 = vmatprep.subr.mxu0 0.0
    %1476 = vmatpush1.msra.mxu0 0.0
    %1477 = vmatprep.subr.mxu0 0.0
    %1478 = vmatpush1.msra.mxu0 0.0
    %1479 = vmatprep.subr.mxu0 0.0
    %1480 = vmatpush1.msra.mxu0 0.0
    %1481 = vmatprep.subr.mxu0 0.0
    %1482 = vmatpush1.msra.mxu0 0.0
    %1483 = vmatprep.subr.mxu0 0.0
    %1484 = vmatpush1.msra.mxu0 0.0
    %1485 = vmatprep.subr.mxu0 0.0
    %1486 = vmatpush1.msra.mxu0 0.0
    %1487 = vmatprep.subr.mxu0 0.0
    %1488 = vmatpush1.msra.mxu0 0.0
    %1489 = vmatprep.subr.mxu0 0.0
    %1490 = vmatpush1.msra.mxu0 0.0
    %1491 = vmatprep.subr.mxu0 0.0
    %1492 = vmatpush1.msra.mxu0 0.0
    %1493 = vmatprep.subr.mxu0 0.0
    %1494 = vmatpush1.msra.mxu0 0.0
    %1495 = vmatprep.subr.mxu0 0.0
    %1496 = vmatpush1.msra.mxu0 0.0
    %1497 = vmatprep.subr.mxu0 0.0
    %1498 = vmatpush1.msra.mxu0 0.0
    %1499 = vmatprep.subr.mxu0 0.0
    %1500 = vmatpush1.msra.mxu0 0.0
    %1501 = vmatprep.mubr.f32.mxu0 0.0
    %1502 = vmatmul.mubr.f32.gmra.mrb[0].mxu0 %v311
    %v1503 = vpop.f32.mrb[0].mxu0
    %v1504 = vadd.f32 %v184, %v1503
    %v1505 = vpop.f32.mrb[0].mxu0
    %1506 = vmatprep.mubr.f32.mxu0 0.0
    %1507 = vmatmul.mubr.f32.gmra.mrb[0].mxu0 %v314
    %v1508 = vpop.f32.mrb[0].mxu0
    %v1509 = vadd.f32 %v185, %v1508
    %v1510 = vpop.f32.mrb[0].mxu0
    %1511 = vmatprep.mubr.f32.mxu0 0.0
    %1512 = vmatmul.mubr.f32.gmra.mrb[0].mxu0 %v317
    %v1513 = vpop.f32.mrb[0].mxu0
    %v1514 = vadd.f32 %v186, %v1513
    %v1515 = vpop.f32.mrb[0].mxu0
    %1516 = vdwg.mxu0
    %v1517 = vmax.f32 %v1504, 0.0
    %v1518 = vmax.f32 %v1509, 0.0
    %v1519 = vmax.f32 %v1514, 0.0
    %v1520 = vmin.f32 %v1517, 1.0
    %v1521 = vmin.f32 %v1518, 1.0
    %v1522 = vmin.f32 %v1519, 1.0
    %1523 = vst [vmem:[#allocation7] sm:$0xff] %v1520
    %1524 = vst [vmem:[#allocation7 + $0x8] sm:$0xff] %v1521
    %1525 = vst [vmem:[#allocation7 + $0x10] sm:$0xff] %v1522
    // Predicated region
    $region34: #{tpu_custom_call.1} parent=1 // pred_check
      _
    $region35: #{tpu_custom_call.1} parent=1 // pred_check_branch
      %1527 = sbr.rel (0) target = $region37
    $region36: #{tpu_custom_call.1} parent=1 // pred_region
      %s1529 = ssub.s32 384, 384
      %1530 = vsyncadd [#allocation4], %s1529
      %s1531 = sshll.u32 [#allocation7], 4
      %s1532 = int_to_ptr.vmem [resolvable:$true] %s1531
      %1537 = dma.vmem_to_hbm [thread:$0]  %s1532, 384, %s6, [#allocation4], 128, 128, 8
    $region37: #{tpu_custom_call.1} parent=1 // pred_fallthru
      _
    // Predicated region
    $region38: #{tpu_custom_call.1} parent=1 // pred_check
      _
    $region39: #{tpu_custom_call.1} parent=1 // pred_check_branch
      %1539 = sbr.rel (0) target = $region41
    $region40: #{tpu_custom_call.1} parent=1 // pred_region
      %1540 = dma.done [#allocation4], 384
    $region41: #{tpu_custom_call.1} parent=1 // pred_fallthru
      _
    %1541 = vsyncpa [#allocation3], 1
    %1542 = vsyncpa [#allocation6], 1
    %1543 = vsyncpa [#allocation4], 1

</llo_original>
